<compile_context>
chip_gen: v7x
topology: tpu7x:2x2x1
jax: 0.10.0
libtpu: 0.0.40
codegen_flags: <defaults>
</compile_context>

<pallas_src>
import functools
import math
import random

import jax
import jax.numpy as jnp
from jax.experimental import pallas as pl
from jax.experimental.pallas import tpu as pltpu


# ----------------------------------------------------------------------------
# Fused encoder + decoder kernel (num_layers == 1, attention == True)
# ----------------------------------------------------------------------------
def _seq2seq_fused_kernel(gin_ref, w_hh_e_ref,
                          w_e_ref,
                          w_fused_d_ref, w_x_ref, b_d_ref,
                          w_fc_ref,
                          target_ref,
                          b_e_ref, b_fc_ref, tf_ref,
                          out_ref, *, hidden_size):
    H = hidden_size
    T, B, _ = gin_ref.shape           # gin: (T, B, 4H) precomputed x@W_ih + b
    P = out_ref.shape[1]              # prediction window

    def lstm_cell(gates, c):
        # gate columns are (i, f, o, g): one sigmoid pass + one tanh pass
        ifo = jax.nn.sigmoid(gates[:, :3 * H])
        g = jnp.tanh(gates[:, 3 * H:])
        i = ifo[:, 0 * H:1 * H]
        f = ifo[:, 1 * H:2 * H]
        o = ifo[:, 2 * H:3 * H]
        c_new = f * c + i * g
        h_new = o * jnp.tanh(c_new)
        return h_new, c_new

    # ---------------- encoder recurrence (input projection already hoisted) --
    w_hh_e = w_hh_e_ref[...]                              # (H, 4H) bf16, loaded once
    h = jnp.zeros((B, H), jnp.float32)                    # PyTorch zero init
    c = jnp.zeros((B, H), jnp.float32)
    hs = []
    # NOTE: static unroll is right at T=8; switch to lax.fori_loop(unroll=True)
    # if T grows past ~16.
    for t in range(T):
        gates = gin_ref[t] + jnp.dot(h.astype(jnp.bfloat16), w_hh_e,
                                     preferred_element_type=jnp.float32)
        h, c = lstm_cell(gates, c)
        hs.append(h)
    enc = jnp.stack(hs, axis=0)                           # (T, B, H), stays in regs

    # ---------------- decoder: attention + LSTM cell + fc --------------------
    w_e_h = w_e_ref[:, :H]                                # (1, H) energy on hidden
    w_e_enc = w_e_ref[:, H:]                              # (1, H) energy on enc out
    b_e = b_e_ref[0]                                      # SMEM scalar
    w_fused = w_fused_d_ref[...]                          # (2H, 4H) bf16: [W_ctx; W_hh]
    w_x = w_x_ref[...]                                    # (1, 4H) input part of W_ih
    b_d = b_d_ref[...]                                    # (1, 4H)
    w_fc = w_fc_ref[...]                                  # (1, H)
    b_fc = b_fc_ref[0]                                    # SMEM scalar
    tgt = target_ref[...]                                 # (B, P)

    # enc-side attention energies are decoder-step independent: hoist (+ b_e).
    e_enc = jnp.sum(enc * w_e_enc[None, :, :], axis=-1, keepdims=True) + b_e   # (T,B,1)

    x = tgt[:, 0:1]                                       # (B, 1) first decoder input
    preds = []
    for t in range(P):                                    # static unroll, P small
        # energy = relu(Linear_2H->1([h ; enc]))          -> (T, B, 1)
        e_h = jnp.sum(h * w_e_h, axis=-1, keepdims=True)                 # (B, 1)
        energy = jax.nn.relu(e_enc + e_h[None, :, :])                    # (T, B, 1)

        # softmax over the T axis, EUP reciprocal for the normalization
        m = jnp.max(energy, axis=0, keepdims=True)
        p = jnp.exp(energy - m)
        attn = p * pl.reciprocal(jnp.sum(p, axis=0, keepdims=True), approx=True)
        context = jnp.sum(attn * enc, axis=0)                            # (B, H)

        # Fused LSTM matmul: [context ; h] (B, 2H) @ [W_ctx ; W_hh] (2H, 4H);
        # the scalar input x contributes via the rank-1 term x * w_x.
        ch = jnp.concatenate([context, h], axis=-1).astype(jnp.bfloat16)  # (B, 2H)
        gates = (jnp.dot(ch, w_fused, preferred_element_type=jnp.float32)
                 + x * w_x                            # (B,1)*(1,4H) == x @ W_ih[H:]
                 + b_d)                                                  # (B, 4H)
        h, c = lstm_cell(gates, c)

        pred = jnp.sum(h * w_fc, axis=-1, keepdims=True) + b_fc          # (B, 1)
        preds.append(pred)

        # next input: ground truth of the just-predicted step if teacher forcing
        # (matches the reference: x = target[:, t:t+1] after producing pred t)
        flag = tf_ref[t]                                                 # SMEM scalar
        x = jnp.where(flag > 0, tgt[:, t:t + 1], pred)

    out_ref[...] = jnp.concatenate(preds, axis=1)        # single (B, P) store


# ----------------------------------------------------------------------------
# Wrapper: gate-column permutation, weight fusion, hoisted input projection,
# and one fused pallas_call.
# ----------------------------------------------------------------------------
@functools.partial(jax.jit, static_argnames=("hidden_size",))
def seq2seq_forward(params, inp, target, tf_flags, *, hidden_size):
    # inp: (B, T, input_size); target: (B, P); tf_flags: (P,) int32
    H = hidden_size
    B, T, _ = inp.shape
    P = target.shape[1]
    inp = inp.astype(jnp.float32)
    target = target.astype(jnp.float32)
    enc_p, dec_p = params["enc"], params["dec"]

    def perm_gates(w):
        # permute 4H gate columns from PyTorch (i, f, g, o) -> kernel (i, f, o, g)
        return jnp.concatenate(
            [w[..., :2 * H], w[..., 3 * H:4 * H], w[..., 2 * H:3 * H]], axis=-1)

    # ---- encoder weights ----
    w_ih_e = perm_gates(enc_p["W_ih"])                       # (I, 4H)
    b_lstm_e = perm_gates(enc_p["b"])                        # (1, 4H)
    w_hh_e = perm_gates(enc_p["W_hh"]).astype(jnp.bfloat16)  # (H, 4H) bf16

    # Hoisted encoder input projection (+ combined bias), delivered time-major
    # so the kernel simply indexes gin_ref[t] inside the recurrence.
    gin = (jnp.einsum("bti,ig->tbg", inp, w_ih_e) + b_lstm_e).astype(jnp.float32)

    # ---- decoder weights: fuse [W_ih[:H]; W_hh] into one (2H, 4H) matrix ----
    w_ih_d = perm_gates(dec_p["W_ih"])                       # (H+1, 4H)
    w_hh_d = perm_gates(dec_p["W_hh"])                       # (H, 4H)
    b_d = perm_gates(dec_p["b"])                             # (1, 4H)
    w_fused_d = jnp.concatenate([w_ih_d[:H, :], w_hh_d],
                                axis=0).astype(jnp.bfloat16) # (2H, 4H) bf16
    w_x_d = w_ih_d[H:, :]                                    # (1, 4H) f32

    kernel = functools.partial(_seq2seq_fused_kernel, hidden_size=H)
    vmem = lambda: pl.BlockSpec(memory_space=pltpu.MemorySpace.VMEM)
    smem = lambda: pl.BlockSpec(memory_space=pltpu.MemorySpace.SMEM)

    out = pl.pallas_call(
        kernel,
        out_shape=jax.ShapeDtypeStruct((B, P), jnp.float32),
        in_specs=[vmem(),   # gin (T, B, 4H)
                  vmem(),   # W_hh encoder (H, 4H) bf16
                  vmem(),   # W_e (1, 2H)
                  vmem(),   # fused decoder weight (2H, 4H) bf16
                  vmem(),   # W_ih decoder input row (1, 4H)
                  vmem(),   # decoder bias (1, 4H)
                  vmem(),   # W_fc (1, H)
                  vmem(),   # target (B, P)
                  smem(),   # b_e scalar
                  smem(),   # b_fc scalar
                  smem()],  # teacher-forcing flags (P,)
        out_specs=pl.BlockSpec(memory_space=pltpu.MemorySpace.VMEM),
    )(gin, w_hh_e,
      dec_p["W_e"],
      w_fused_d, w_x_d, b_d,
      dec_p["W_fc"],
      target,
      dec_p["b_e"].reshape(1), dec_p["b_fc"].reshape(1),
      tf_flags.astype(jnp.int32))
    return out


# ----------------------------------------------------------------------------
# Deterministic parameter init (shapes follow the nn.Module __init__)
# ----------------------------------------------------------------------------
def init_params(key, input_size, hidden_size, output_size):
    assert output_size == 1, "decoder input layout implies output_size == 1"
    H = hidden_size
    keys = jax.random.split(key, 12)

    def u(k, shape, bound):
        return jax.random.uniform(k, shape, jnp.float32, -bound, bound)

    k_lstm = 1.0 / math.sqrt(H)
    k_e = 1.0 / math.sqrt(2 * H)
    k_fc = 1.0 / math.sqrt(H)

    enc = {
        "W_ih": u(keys[0], (input_size, 4 * H), k_lstm),
        # PyTorch has separate b_ih / b_hh; forward only ever uses their sum.
        "W_hh": u(keys[1], (H, 4 * H), k_lstm),
        "b":    u(keys[2], (1, 4 * H), k_lstm) + u(keys[3], (1, 4 * H), k_lstm),
    }
    dec = {
        # attention energy: Linear(2H, 1) — PyTorch (out, in) layout,
        # columns split as [hidden ; encoder_output] (reference concat order)
        "W_e":  u(keys[4], (1, 2 * H), k_e),
        "b_e":  u(keys[5], (1, 1), k_e),
        # decoder LSTM layer 0: input = hidden + output_size (= H + 1)
        "W_ih": u(keys[6], (H + output_size, 4 * H), k_lstm),
        "W_hh": u(keys[7], (H, 4 * H), k_lstm),
        "b":    u(keys[8], (1, 4 * H), k_lstm) + u(keys[9], (1, 4 * H), k_lstm),
        # fc: Linear(H, output_size) — PyTorch (out, in) layout
        "W_fc": u(keys[10], (output_size, H), k_fc),
        "b_fc": u(keys[11], (1, output_size), k_fc),
    }
    return {"enc": enc, "dec": dec}


if __name__ == "__main__":
    B = 2
    T_IN = 8
    INPUT_SIZE = 4
    HIDDEN = 32
    NUM_LAYERS = 1          # dropout forced to 0 for num_layers == 1 (as in the module)
    OUTPUT_SIZE = 1
    PRED_WINDOW = 4
    TEACHER_FORCING_RATIO = 0.5

    key = jax.random.PRNGKey(0)
    k_params, k_in, k_tgt = jax.random.split(key, 3)

    params = init_params(k_params, INPUT_SIZE, HIDDEN, OUTPUT_SIZE)
    inp = jax.random.normal(k_in, (B, T_IN, INPUT_SIZE), jnp.float32)
    target = jax.random.normal(k_tgt, (B, PRED_WINDOW), jnp.float32)

    # deterministic host-side stand-in for `random.random() < teacher_forcing_ratio`,
    # passed as runtime int32 flags so different draws do not recompile the kernel.
    rng = random.Random(0)
    tf_flags = jnp.array(
        [int(rng.random() < TEACHER_FORCING_RATIO) for _ in range(PRED_WINDOW)],
        dtype=jnp.int32)

    out = seq2seq_forward(params, inp, target, tf_flags, hidden_size=HIDDEN)
    out = jax.block_until_ready(out)
    assert out.shape == (B, PRED_WINDOW), out.shape
    assert bool(jnp.all(jnp.isfinite(out)))
    print("KERNEL_OK")
</pallas_src>

<mosaic_0001>
module attributes {stable_mosaic.version = 11 : i64} {
  func.func @_seq2seq_fused_kernel(%arg0: memref<8x2x128xf32, #tpu.memory_space<vmem>>, %arg1: memref<32x128xbf16, #tpu.memory_space<vmem>>, %arg2: memref<1x64xf32, #tpu.memory_space<vmem>>, %arg3: memref<64x128xbf16, #tpu.memory_space<vmem>>, %arg4: memref<1x128xf32, #tpu.memory_space<vmem>>, %arg5: memref<1x128xf32, #tpu.memory_space<vmem>>, %arg6: memref<1x32xf32, #tpu.memory_space<vmem>>, %arg7: memref<2x4xf32, #tpu.memory_space<vmem>>, %arg8: memref<1xf32, #tpu.memory_space<smem>>, %arg9: memref<1xf32, #tpu.memory_space<smem>>, %arg10: memref<4xi32, #tpu.memory_space<smem>>, %arg11: memref<2x4xf32, #tpu.memory_space<vmem>>) attributes {dimension_semantics = [], scalar_prefetch = 0 : i64, scratch_operands = 0 : i64, tpu.core_type = #tpu.core_type<tc>} {
    %c0 = arith.constant 0 : index
    %c0_0 = arith.constant 0 : index
    %0 = vector.load %arg1[%c0, %c0_0] : memref<32x128xbf16, #tpu.memory_space<vmem>>, vector<32x128xbf16>
    %cst = arith.constant 0.000000e+00 : f32
    %1 = vector.broadcast %cst : f32 to vector<2x32xf32>
    %cst_1 = arith.constant 0.000000e+00 : f32
    %2 = vector.broadcast %cst_1 : f32 to vector<2x32xf32>
    %c0_2 = arith.constant 0 : index
    %c0_3 = arith.constant 0 : index
    %c0_4 = arith.constant 0 : index
    %3 = vector.load %arg0[%c0_2, %c0_3, %c0_4] : memref<8x2x128xf32, #tpu.memory_space<vmem>>, vector<1x2x128xf32>
    %4 = vector.shape_cast %3 : vector<1x2x128xf32> to vector<2x128xf32>
    %5 = arith.truncf %1 : vector<2x32xf32> to vector<2x32xbf16>
    %cst_5 = arith.constant dense<0.000000e+00> : vector<2x128xf32>
    %6 = tpu.matmul %5, %0, %cst_5 {dimension_numbers = #tpu.dot_dimension_numbers<[1], [0], [0], [1], [0, 0, 1, 1], [], []>} : vector<2x32xbf16>, vector<32x128xbf16>, vector<2x128xf32> -> vector<2x128xf32>
    %7 = arith.addf %4, %6 : vector<2x128xf32>
    %8 = vector.extract_strided_slice %7 {offsets = [0, 0], sizes = [2, 96], strides = [1, 1]} : vector<2x128xf32> to vector<2x96xf32>
    %9 = arith.negf %8 : vector<2x96xf32>
    %10 = math.exp %9 : vector<2x96xf32>
    %cst_6 = arith.constant 1.000000e+00 : f32
    %11 = vector.broadcast %cst_6 : f32 to vector<2x96xf32>
    %12 = arith.addf %11, %10 : vector<2x96xf32>
    %13 = arith.divf %11, %12 : vector<2x96xf32>
    %14 = vector.extract_strided_slice %7 {offsets = [0, 96], sizes = [2, 32], strides = [1, 1]} : vector<2x128xf32> to vector<2x32xf32>
    %15 = math.tanh %14 : vector<2x32xf32>
    %16 = vector.extract_strided_slice %13 {offsets = [0, 0], sizes = [2, 32], strides = [1, 1]} : vector<2x96xf32> to vector<2x32xf32>
    %17 = vector.extract_strided_slice %13 {offsets = [0, 32], sizes = [2, 32], strides = [1, 1]} : vector<2x96xf32> to vector<2x32xf32>
    %18 = vector.extract_strided_slice %13 {offsets = [0, 64], sizes = [2, 32], strides = [1, 1]} : vector<2x96xf32> to vector<2x32xf32>
    %19 = arith.mulf %17, %2 : vector<2x32xf32>
    %20 = arith.mulf %16, %15 : vector<2x32xf32>
    %21 = arith.addf %19, %20 : vector<2x32xf32>
    %22 = math.tanh %21 : vector<2x32xf32>
    %23 = arith.mulf %18, %22 : vector<2x32xf32>
    %c1 = arith.constant 1 : index
    %c0_7 = arith.constant 0 : index
    %c0_8 = arith.constant 0 : index
    %24 = vector.load %arg0[%c1, %c0_7, %c0_8] : memref<8x2x128xf32, #tpu.memory_space<vmem>>, vector<1x2x128xf32>
    %25 = vector.shape_cast %24 : vector<1x2x128xf32> to vector<2x128xf32>
    %26 = arith.truncf %23 : vector<2x32xf32> to vector<2x32xbf16>
    %cst_9 = arith.constant dense<0.000000e+00> : vector<2x128xf32>
    %27 = tpu.matmul %26, %0, %cst_9 {dimension_numbers = #tpu.dot_dimension_numbers<[1], [0], [0], [1], [0, 0, 1, 1], [], []>} : vector<2x32xbf16>, vector<32x128xbf16>, vector<2x128xf32> -> vector<2x128xf32>
    %28 = arith.addf %25, %27 : vector<2x128xf32>
    %29 = vector.extract_strided_slice %28 {offsets = [0, 0], sizes = [2, 96], strides = [1, 1]} : vector<2x128xf32> to vector<2x96xf32>
    %30 = arith.negf %29 : vector<2x96xf32>
    %31 = math.exp %30 : vector<2x96xf32>
    %cst_10 = arith.constant 1.000000e+00 : f32
    %32 = vector.broadcast %cst_10 : f32 to vector<2x96xf32>
    %33 = arith.addf %32, %31 : vector<2x96xf32>
    %34 = arith.divf %32, %33 : vector<2x96xf32>
    %35 = vector.extract_strided_slice %28 {offsets = [0, 96], sizes = [2, 32], strides = [1, 1]} : vector<2x128xf32> to vector<2x32xf32>
    %36 = math.tanh %35 : vector<2x32xf32>
    %37 = vector.extract_strided_slice %34 {offsets = [0, 0], sizes = [2, 32], strides = [1, 1]} : vector<2x96xf32> to vector<2x32xf32>
    %38 = vector.extract_strided_slice %34 {offsets = [0, 32], sizes = [2, 32], strides = [1, 1]} : vector<2x96xf32> to vector<2x32xf32>
    %39 = vector.extract_strided_slice %34 {offsets = [0, 64], sizes = [2, 32], strides = [1, 1]} : vector<2x96xf32> to vector<2x32xf32>
    %40 = arith.mulf %38, %21 : vector<2x32xf32>
    %41 = arith.mulf %37, %36 : vector<2x32xf32>
    %42 = arith.addf %40, %41 : vector<2x32xf32>
    %43 = math.tanh %42 : vector<2x32xf32>
    %44 = arith.mulf %39, %43 : vector<2x32xf32>
    %c2 = arith.constant 2 : index
    %c0_11 = arith.constant 0 : index
    %c0_12 = arith.constant 0 : index
    %45 = vector.load %arg0[%c2, %c0_11, %c0_12] : memref<8x2x128xf32, #tpu.memory_space<vmem>>, vector<1x2x128xf32>
    %46 = vector.shape_cast %45 : vector<1x2x128xf32> to vector<2x128xf32>
    %47 = arith.truncf %44 : vector<2x32xf32> to vector<2x32xbf16>
    %cst_13 = arith.constant dense<0.000000e+00> : vector<2x128xf32>
    %48 = tpu.matmul %47, %0, %cst_13 {dimension_numbers = #tpu.dot_dimension_numbers<[1], [0], [0], [1], [0, 0, 1, 1], [], []>} : vector<2x32xbf16>, vector<32x128xbf16>, vector<2x128xf32> -> vector<2x128xf32>
    %49 = arith.addf %46, %48 : vector<2x128xf32>
    %50 = vector.extract_strided_slice %49 {offsets = [0, 0], sizes = [2, 96], strides = [1, 1]} : vector<2x128xf32> to vector<2x96xf32>
    %51 = arith.negf %50 : vector<2x96xf32>
    %52 = math.exp %51 : vector<2x96xf32>
    %cst_14 = arith.constant 1.000000e+00 : f32
    %53 = vector.broadcast %cst_14 : f32 to vector<2x96xf32>
    %54 = arith.addf %53, %52 : vector<2x96xf32>
    %55 = arith.divf %53, %54 : vector<2x96xf32>
    %56 = vector.extract_strided_slice %49 {offsets = [0, 96], sizes = [2, 32], strides = [1, 1]} : vector<2x128xf32> to vector<2x32xf32>
    %57 = math.tanh %56 : vector<2x32xf32>
    %58 = vector.extract_strided_slice %55 {offsets = [0, 0], sizes = [2, 32], strides = [1, 1]} : vector<2x96xf32> to vector<2x32xf32>
    %59 = vector.extract_strided_slice %55 {offsets = [0, 32], sizes = [2, 32], strides = [1, 1]} : vector<2x96xf32> to vector<2x32xf32>
    %60 = vector.extract_strided_slice %55 {offsets = [0, 64], sizes = [2, 32], strides = [1, 1]} : vector<2x96xf32> to vector<2x32xf32>
    %61 = arith.mulf %59, %42 : vector<2x32xf32>
    %62 = arith.mulf %58, %57 : vector<2x32xf32>
    %63 = arith.addf %61, %62 : vector<2x32xf32>
    %64 = math.tanh %63 : vector<2x32xf32>
    %65 = arith.mulf %60, %64 : vector<2x32xf32>
    %c3 = arith.constant 3 : index
    %c0_15 = arith.constant 0 : index
    %c0_16 = arith.constant 0 : index
    %66 = vector.load %arg0[%c3, %c0_15, %c0_16] : memref<8x2x128xf32, #tpu.memory_space<vmem>>, vector<1x2x128xf32>
    %67 = vector.shape_cast %66 : vector<1x2x128xf32> to vector<2x128xf32>
    %68 = arith.truncf %65 : vector<2x32xf32> to vector<2x32xbf16>
    %cst_17 = arith.constant dense<0.000000e+00> : vector<2x128xf32>
    %69 = tpu.matmul %68, %0, %cst_17 {dimension_numbers = #tpu.dot_dimension_numbers<[1], [0], [0], [1], [0, 0, 1, 1], [], []>} : vector<2x32xbf16>, vector<32x128xbf16>, vector<2x128xf32> -> vector<2x128xf32>
    %70 = arith.addf %67, %69 : vector<2x128xf32>
    %71 = vector.extract_strided_slice %70 {offsets = [0, 0], sizes = [2, 96], strides = [1, 1]} : vector<2x128xf32> to vector<2x96xf32>
    %72 = arith.negf %71 : vector<2x96xf32>
    %73 = math.exp %72 : vector<2x96xf32>
    %cst_18 = arith.constant 1.000000e+00 : f32
    %74 = vector.broadcast %cst_18 : f32 to vector<2x96xf32>
    %75 = arith.addf %74, %73 : vector<2x96xf32>
    %76 = arith.divf %74, %75 : vector<2x96xf32>
    %77 = vector.extract_strided_slice %70 {offsets = [0, 96], sizes = [2, 32], strides = [1, 1]} : vector<2x128xf32> to vector<2x32xf32>
    %78 = math.tanh %77 : vector<2x32xf32>
    %79 = vector.extract_strided_slice %76 {offsets = [0, 0], sizes = [2, 32], strides = [1, 1]} : vector<2x96xf32> to vector<2x32xf32>
    %80 = vector.extract_strided_slice %76 {offsets = [0, 32], sizes = [2, 32], strides = [1, 1]} : vector<2x96xf32> to vector<2x32xf32>
    %81 = vector.extract_strided_slice %76 {offsets = [0, 64], sizes = [2, 32], strides = [1, 1]} : vector<2x96xf32> to vector<2x32xf32>
    %82 = arith.mulf %80, %63 : vector<2x32xf32>
    %83 = arith.mulf %79, %78 : vector<2x32xf32>
    %84 = arith.addf %82, %83 : vector<2x32xf32>
    %85 = math.tanh %84 : vector<2x32xf32>
    %86 = arith.mulf %81, %85 : vector<2x32xf32>
    %c4 = arith.constant 4 : index
    %c0_19 = arith.constant 0 : index
    %c0_20 = arith.constant 0 : index
    %87 = vector.load %arg0[%c4, %c0_19, %c0_20] : memref<8x2x128xf32, #tpu.memory_space<vmem>>, vector<1x2x128xf32>
    %88 = vector.shape_cast %87 : vector<1x2x128xf32> to vector<2x128xf32>
    %89 = arith.truncf %86 : vector<2x32xf32> to vector<2x32xbf16>
    %cst_21 = arith.constant dense<0.000000e+00> : vector<2x128xf32>
    %90 = tpu.matmul %89, %0, %cst_21 {dimension_numbers = #tpu.dot_dimension_numbers<[1], [0], [0], [1], [0, 0, 1, 1], [], []>} : vector<2x32xbf16>, vector<32x128xbf16>, vector<2x128xf32> -> vector<2x128xf32>
    %91 = arith.addf %88, %90 : vector<2x128xf32>
    %92 = vector.extract_strided_slice %91 {offsets = [0, 0], sizes = [2, 96], strides = [1, 1]} : vector<2x128xf32> to vector<2x96xf32>
    %93 = arith.negf %92 : vector<2x96xf32>
    %94 = math.exp %93 : vector<2x96xf32>
    %cst_22 = arith.constant 1.000000e+00 : f32
    %95 = vector.broadcast %cst_22 : f32 to vector<2x96xf32>
    %96 = arith.addf %95, %94 : vector<2x96xf32>
    %97 = arith.divf %95, %96 : vector<2x96xf32>
    %98 = vector.extract_strided_slice %91 {offsets = [0, 96], sizes = [2, 32], strides = [1, 1]} : vector<2x128xf32> to vector<2x32xf32>
    %99 = math.tanh %98 : vector<2x32xf32>
    %100 = vector.extract_strided_slice %97 {offsets = [0, 0], sizes = [2, 32], strides = [1, 1]} : vector<2x96xf32> to vector<2x32xf32>
    %101 = vector.extract_strided_slice %97 {offsets = [0, 32], sizes = [2, 32], strides = [1, 1]} : vector<2x96xf32> to vector<2x32xf32>
    %102 = vector.extract_strided_slice %97 {offsets = [0, 64], sizes = [2, 32], strides = [1, 1]} : vector<2x96xf32> to vector<2x32xf32>
    %103 = arith.mulf %101, %84 : vector<2x32xf32>
    %104 = arith.mulf %100, %99 : vector<2x32xf32>
    %105 = arith.addf %103, %104 : vector<2x32xf32>
    %106 = math.tanh %105 : vector<2x32xf32>
    %107 = arith.mulf %102, %106 : vector<2x32xf32>
    %c5 = arith.constant 5 : index
    %c0_23 = arith.constant 0 : index
    %c0_24 = arith.constant 0 : index
    %108 = vector.load %arg0[%c5, %c0_23, %c0_24] : memref<8x2x128xf32, #tpu.memory_space<vmem>>, vector<1x2x128xf32>
    %109 = vector.shape_cast %108 : vector<1x2x128xf32> to vector<2x128xf32>
    %110 = arith.truncf %107 : vector<2x32xf32> to vector<2x32xbf16>
    %cst_25 = arith.constant dense<0.000000e+00> : vector<2x128xf32>
    %111 = tpu.matmul %110, %0, %cst_25 {dimension_numbers = #tpu.dot_dimension_numbers<[1], [0], [0], [1], [0, 0, 1, 1], [], []>} : vector<2x32xbf16>, vector<32x128xbf16>, vector<2x128xf32> -> vector<2x128xf32>
    %112 = arith.addf %109, %111 : vector<2x128xf32>
    %113 = vector.extract_strided_slice %112 {offsets = [0, 0], sizes = [2, 96], strides = [1, 1]} : vector<2x128xf32> to vector<2x96xf32>
    %114 = arith.negf %113 : vector<2x96xf32>
    %115 = math.exp %114 : vector<2x96xf32>
    %cst_26 = arith.constant 1.000000e+00 : f32
    %116 = vector.broadcast %cst_26 : f32 to vector<2x96xf32>
    %117 = arith.addf %116, %115 : vector<2x96xf32>
    %118 = arith.divf %116, %117 : vector<2x96xf32>
    %119 = vector.extract_strided_slice %112 {offsets = [0, 96], sizes = [2, 32], strides = [1, 1]} : vector<2x128xf32> to vector<2x32xf32>
    %120 = math.tanh %119 : vector<2x32xf32>
    %121 = vector.extract_strided_slice %118 {offsets = [0, 0], sizes = [2, 32], strides = [1, 1]} : vector<2x96xf32> to vector<2x32xf32>
    %122 = vector.extract_strided_slice %118 {offsets = [0, 32], sizes = [2, 32], strides = [1, 1]} : vector<2x96xf32> to vector<2x32xf32>
    %123 = vector.extract_strided_slice %118 {offsets = [0, 64], sizes = [2, 32], strides = [1, 1]} : vector<2x96xf32> to vector<2x32xf32>
    %124 = arith.mulf %122, %105 : vector<2x32xf32>
    %125 = arith.mulf %121, %120 : vector<2x32xf32>
    %126 = arith.addf %124, %125 : vector<2x32xf32>
    %127 = math.tanh %126 : vector<2x32xf32>
    %128 = arith.mulf %123, %127 : vector<2x32xf32>
    %c6 = arith.constant 6 : index
    %c0_27 = arith.constant 0 : index
    %c0_28 = arith.constant 0 : index
    %129 = vector.load %arg0[%c6, %c0_27, %c0_28] : memref<8x2x128xf32, #tpu.memory_space<vmem>>, vector<1x2x128xf32>
    %130 = vector.shape_cast %129 : vector<1x2x128xf32> to vector<2x128xf32>
    %131 = arith.truncf %128 : vector<2x32xf32> to vector<2x32xbf16>
    %cst_29 = arith.constant dense<0.000000e+00> : vector<2x128xf32>
    %132 = tpu.matmul %131, %0, %cst_29 {dimension_numbers = #tpu.dot_dimension_numbers<[1], [0], [0], [1], [0, 0, 1, 1], [], []>} : vector<2x32xbf16>, vector<32x128xbf16>, vector<2x128xf32> -> vector<2x128xf32>
    %133 = arith.addf %130, %132 : vector<2x128xf32>
    %134 = vector.extract_strided_slice %133 {offsets = [0, 0], sizes = [2, 96], strides = [1, 1]} : vector<2x128xf32> to vector<2x96xf32>
    %135 = arith.negf %134 : vector<2x96xf32>
    %136 = math.exp %135 : vector<2x96xf32>
    %cst_30 = arith.constant 1.000000e+00 : f32
    %137 = vector.broadcast %cst_30 : f32 to vector<2x96xf32>
    %138 = arith.addf %137, %136 : vector<2x96xf32>
    %139 = arith.divf %137, %138 : vector<2x96xf32>
    %140 = vector.extract_strided_slice %133 {offsets = [0, 96], sizes = [2, 32], strides = [1, 1]} : vector<2x128xf32> to vector<2x32xf32>
    %141 = math.tanh %140 : vector<2x32xf32>
    %142 = vector.extract_strided_slice %139 {offsets = [0, 0], sizes = [2, 32], strides = [1, 1]} : vector<2x96xf32> to vector<2x32xf32>
    %143 = vector.extract_strided_slice %139 {offsets = [0, 32], sizes = [2, 32], strides = [1, 1]} : vector<2x96xf32> to vector<2x32xf32>
    %144 = vector.extract_strided_slice %139 {offsets = [0, 64], sizes = [2, 32], strides = [1, 1]} : vector<2x96xf32> to vector<2x32xf32>
    %145 = arith.mulf %143, %126 : vector<2x32xf32>
    %146 = arith.mulf %142, %141 : vector<2x32xf32>
    %147 = arith.addf %145, %146 : vector<2x32xf32>
    %148 = math.tanh %147 : vector<2x32xf32>
    %149 = arith.mulf %144, %148 : vector<2x32xf32>
    %c7 = arith.constant 7 : index
    %c0_31 = arith.constant 0 : index
    %c0_32 = arith.constant 0 : index
    %150 = vector.load %arg0[%c7, %c0_31, %c0_32] : memref<8x2x128xf32, #tpu.memory_space<vmem>>, vector<1x2x128xf32>
    %151 = vector.shape_cast %150 : vector<1x2x128xf32> to vector<2x128xf32>
    %152 = arith.truncf %149 : vector<2x32xf32> to vector<2x32xbf16>
    %cst_33 = arith.constant dense<0.000000e+00> : vector<2x128xf32>
    %153 = tpu.matmul %152, %0, %cst_33 {dimension_numbers = #tpu.dot_dimension_numbers<[1], [0], [0], [1], [0, 0, 1, 1], [], []>} : vector<2x32xbf16>, vector<32x128xbf16>, vector<2x128xf32> -> vector<2x128xf32>
    %154 = arith.addf %151, %153 : vector<2x128xf32>
    %155 = vector.extract_strided_slice %154 {offsets = [0, 0], sizes = [2, 96], strides = [1, 1]} : vector<2x128xf32> to vector<2x96xf32>
    %156 = arith.negf %155 : vector<2x96xf32>
    %157 = math.exp %156 : vector<2x96xf32>
    %cst_34 = arith.constant 1.000000e+00 : f32
    %158 = vector.broadcast %cst_34 : f32 to vector<2x96xf32>
    %159 = arith.addf %158, %157 : vector<2x96xf32>
    %160 = arith.divf %158, %159 : vector<2x96xf32>
    %161 = vector.extract_strided_slice %154 {offsets = [0, 96], sizes = [2, 32], strides = [1, 1]} : vector<2x128xf32> to vector<2x32xf32>
    %162 = math.tanh %161 : vector<2x32xf32>
    %163 = vector.extract_strided_slice %160 {offsets = [0, 0], sizes = [2, 32], strides = [1, 1]} : vector<2x96xf32> to vector<2x32xf32>
    %164 = vector.extract_strided_slice %160 {offsets = [0, 32], sizes = [2, 32], strides = [1, 1]} : vector<2x96xf32> to vector<2x32xf32>
    %165 = vector.extract_strided_slice %160 {offsets = [0, 64], sizes = [2, 32], strides = [1, 1]} : vector<2x96xf32> to vector<2x32xf32>
    %166 = arith.mulf %164, %147 : vector<2x32xf32>
    %167 = arith.mulf %163, %162 : vector<2x32xf32>
    %168 = arith.addf %166, %167 : vector<2x32xf32>
    %169 = math.tanh %168 : vector<2x32xf32>
    %170 = arith.mulf %165, %169 : vector<2x32xf32>
    %171 = vector.shape_cast %23 : vector<2x32xf32> to vector<1x2x32xf32>
    %172 = vector.shape_cast %44 : vector<2x32xf32> to vector<1x2x32xf32>
    %173 = vector.shape_cast %65 : vector<2x32xf32> to vector<1x2x32xf32>
    %174 = vector.shape_cast %86 : vector<2x32xf32> to vector<1x2x32xf32>
    %175 = vector.shape_cast %107 : vector<2x32xf32> to vector<1x2x32xf32>
    %176 = vector.shape_cast %128 : vector<2x32xf32> to vector<1x2x32xf32>
    %177 = vector.shape_cast %149 : vector<2x32xf32> to vector<1x2x32xf32>
    %178 = vector.shape_cast %170 : vector<2x32xf32> to vector<1x2x32xf32>
    %179 = tpu.concatenate %171, %172, %173, %174, %175, %176, %177, %178 in 0 : vector<1x2x32xf32>, vector<1x2x32xf32>, vector<1x2x32xf32>, vector<1x2x32xf32>, vector<1x2x32xf32>, vector<1x2x32xf32>, vector<1x2x32xf32>, vector<1x2x32xf32> -> vector<8x2x32xf32>
    %c0_35 = arith.constant 0 : index
    %c0_36 = arith.constant 0 : index
    %180 = vector.load %arg2[%c0_35, %c0_36] : memref<1x64xf32, #tpu.memory_space<vmem>>, vector<1x32xf32>
    %c0_37 = arith.constant 0 : index
    %c32 = arith.constant 32 : index
    %181 = vector.load %arg2[%c0_37, %c32] : memref<1x64xf32, #tpu.memory_space<vmem>>, vector<1x32xf32>
    %c0_38 = arith.constant 0 : index
    %182 = memref.load %arg8[%c0_38] : memref<1xf32, #tpu.memory_space<smem>>
    %c0_39 = arith.constant 0 : index
    %c0_40 = arith.constant 0 : index
    %183 = vector.load %arg3[%c0_39, %c0_40] : memref<64x128xbf16, #tpu.memory_space<vmem>>, vector<64x128xbf16>
    %c0_41 = arith.constant 0 : index
    %c0_42 = arith.constant 0 : index
    %184 = vector.load %arg4[%c0_41, %c0_42] : memref<1x128xf32, #tpu.memory_space<vmem>>, vector<1x128xf32>
    %c0_43 = arith.constant 0 : index
    %c0_44 = arith.constant 0 : index
    %185 = vector.load %arg5[%c0_43, %c0_44] : memref<1x128xf32, #tpu.memory_space<vmem>>, vector<1x128xf32>
    %c0_45 = arith.constant 0 : index
    %c0_46 = arith.constant 0 : index
    %186 = vector.load %arg6[%c0_45, %c0_46] : memref<1x32xf32, #tpu.memory_space<vmem>>, vector<1x32xf32>
    %c0_47 = arith.constant 0 : index
    %187 = memref.load %arg9[%c0_47] : memref<1xf32, #tpu.memory_space<smem>>
    %c0_48 = arith.constant 0 : index
    %c0_49 = arith.constant 0 : index
    %188 = vector.load %arg7[%c0_48, %c0_49] : memref<2x4xf32, #tpu.memory_space<vmem>>, vector<2x4xf32>
    %189 = vector.shape_cast %181 : vector<1x32xf32> to vector<1x1x32xf32>
    %190 = vector.broadcast %189 : vector<1x1x32xf32> to vector<8x2x32xf32>
    %191 = arith.mulf %179, %190 : vector<8x2x32xf32>
    %cst_50 = arith.constant dense<0.000000e+00> : vector<8x2xf32>
    %192 = vector.multi_reduction <add>, %191, %cst_50 [2] : vector<8x2x32xf32> to vector<8x2xf32>
    %193 = vector.shape_cast %192 : vector<8x2xf32> to vector<8x2x1xf32>
    %194 = vector.broadcast %182 : f32 to vector<8x2x1xf32>
    %195 = arith.addf %193, %194 : vector<8x2x1xf32>
    %196 = vector.extract_strided_slice %188 {offsets = [0, 0], sizes = [2, 1], strides = [1, 1]} : vector<2x4xf32> to vector<2x1xf32>
    %197 = vector.broadcast %180 : vector<1x32xf32> to vector<2x32xf32>
    %198 = arith.mulf %170, %197 : vector<2x32xf32>
    %cst_51 = arith.constant dense<0.000000e+00> : vector<2xf32>
    %199 = vector.multi_reduction <add>, %198, %cst_51 [1] : vector<2x32xf32> to vector<2xf32>
    %200 = vector.shape_cast %199 : vector<2xf32> to vector<2x1xf32>
    %201 = vector.shape_cast %200 : vector<2x1xf32> to vector<1x2x1xf32>
    %202 = vector.broadcast %201 : vector<1x2x1xf32> to vector<8x2x1xf32>
    %203 = arith.addf %195, %202 : vector<8x2x1xf32>
    %cst_52 = arith.constant 0.000000e+00 : f32
    %204 = vector.broadcast %cst_52 : f32 to vector<8x2x1xf32>
    %205 = arith.maximumf %203, %204 : vector<8x2x1xf32>
    %cst_53 = arith.constant dense<0xFF800000> : vector<2x1xf32>
    %206 = vector.multi_reduction <maximumf>, %205, %cst_53 [0] : vector<8x2x1xf32> to vector<2x1xf32>
    %207 = vector.shape_cast %206 : vector<2x1xf32> to vector<1x2x1xf32>
    %208 = vector.broadcast %207 : vector<1x2x1xf32> to vector<8x2x1xf32>
    %209 = arith.subf %205, %208 : vector<8x2x1xf32>
    %210 = math.exp %209 : vector<8x2x1xf32>
    %cst_54 = arith.constant dense<0.000000e+00> : vector<2x1xf32>
    %211 = vector.multi_reduction <add>, %210, %cst_54 [0] : vector<8x2x1xf32> to vector<2x1xf32>
    %212 = vector.shape_cast %211 : vector<2x1xf32> to vector<1x2x1xf32>
    %213 = tpu.reciprocal %212 {approx = true} : vector<1x2x1xf32> -> vector<1x2x1xf32>
    %214 = vector.broadcast %213 : vector<1x2x1xf32> to vector<8x2x1xf32>
    %215 = arith.mulf %210, %214 : vector<8x2x1xf32>
    %216 = vector.broadcast %215 : vector<8x2x1xf32> to vector<8x2x32xf32>
    %217 = arith.mulf %216, %179 : vector<8x2x32xf32>
    %cst_55 = arith.constant dense<0.000000e+00> : vector<2x32xf32>
    %218 = vector.multi_reduction <add>, %217, %cst_55 [0] : vector<8x2x32xf32> to vector<2x32xf32>
    %219 = tpu.concatenate %218, %170 in 1 : vector<2x32xf32>, vector<2x32xf32> -> vector<2x64xf32>
    %220 = arith.truncf %219 : vector<2x64xf32> to vector<2x64xbf16>
    %cst_56 = arith.constant dense<0.000000e+00> : vector<2x128xf32>
    %221 = tpu.matmul %220, %183, %cst_56 {dimension_numbers = #tpu.dot_dimension_numbers<[1], [0], [0], [1], [0, 0, 1, 1], [], []>} : vector<2x64xbf16>, vector<64x128xbf16>, vector<2x128xf32> -> vector<2x128xf32>
    %222 = vector.broadcast %196 : vector<2x1xf32> to vector<2x128xf32>
    %223 = vector.broadcast %184 : vector<1x128xf32> to vector<2x128xf32>
    %224 = arith.mulf %222, %223 : vector<2x128xf32>
    %225 = arith.addf %221, %224 : vector<2x128xf32>
    %226 = vector.broadcast %185 : vector<1x128xf32> to vector<2x128xf32>
    %227 = arith.addf %225, %226 : vector<2x128xf32>
    %228 = vector.extract_strided_slice %227 {offsets = [0, 0], sizes = [2, 96], strides = [1, 1]} : vector<2x128xf32> to vector<2x96xf32>
    %229 = arith.negf %228 : vector<2x96xf32>
    %230 = math.exp %229 : vector<2x96xf32>
    %cst_57 = arith.constant 1.000000e+00 : f32
    %231 = vector.broadcast %cst_57 : f32 to vector<2x96xf32>
    %232 = arith.addf %231, %230 : vector<2x96xf32>
    %233 = arith.divf %231, %232 : vector<2x96xf32>
    %234 = vector.extract_strided_slice %227 {offsets = [0, 96], sizes = [2, 32], strides = [1, 1]} : vector<2x128xf32> to vector<2x32xf32>
    %235 = math.tanh %234 : vector<2x32xf32>
    %236 = vector.extract_strided_slice %233 {offsets = [0, 0], sizes = [2, 32], strides = [1, 1]} : vector<2x96xf32> to vector<2x32xf32>
    %237 = vector.extract_strided_slice %233 {offsets = [0, 32], sizes = [2, 32], strides = [1, 1]} : vector<2x96xf32> to vector<2x32xf32>
    %238 = vector.extract_strided_slice %233 {offsets = [0, 64], sizes = [2, 32], strides = [1, 1]} : vector<2x96xf32> to vector<2x32xf32>
    %239 = arith.mulf %237, %168 : vector<2x32xf32>
    %240 = arith.mulf %236, %235 : vector<2x32xf32>
    %241 = arith.addf %239, %240 : vector<2x32xf32>
    %242 = math.tanh %241 : vector<2x32xf32>
    %243 = arith.mulf %238, %242 : vector<2x32xf32>
    %244 = vector.broadcast %186 : vector<1x32xf32> to vector<2x32xf32>
    %245 = arith.mulf %243, %244 : vector<2x32xf32>
    %cst_58 = arith.constant dense<0.000000e+00> : vector<2xf32>
    %246 = vector.multi_reduction <add>, %245, %cst_58 [1] : vector<2x32xf32> to vector<2xf32>
    %247 = vector.shape_cast %246 : vector<2xf32> to vector<2x1xf32>
    %248 = vector.broadcast %187 : f32 to vector<2x1xf32>
    %249 = arith.addf %247, %248 : vector<2x1xf32>
    %c0_59 = arith.constant 0 : index
    %250 = memref.load %arg10[%c0_59] : memref<4xi32, #tpu.memory_space<smem>>
    %c0_i32 = arith.constant 0 : i32
    %251 = arith.cmpi sgt, %250, %c0_i32 : i32
    %252 = vector.extract_strided_slice %188 {offsets = [0, 0], sizes = [2, 1], strides = [1, 1]} : vector<2x4xf32> to vector<2x1xf32>
    %253 = arith.select %251, %252, %249 : vector<2x1xf32>
    %254 = vector.broadcast %180 : vector<1x32xf32> to vector<2x32xf32>
    %255 = arith.mulf %243, %254 : vector<2x32xf32>
    %cst_60 = arith.constant dense<0.000000e+00> : vector<2xf32>
    %256 = vector.multi_reduction <add>, %255, %cst_60 [1] : vector<2x32xf32> to vector<2xf32>
    %257 = vector.shape_cast %256 : vector<2xf32> to vector<2x1xf32>
    %258 = vector.shape_cast %257 : vector<2x1xf32> to vector<1x2x1xf32>
    %259 = vector.broadcast %258 : vector<1x2x1xf32> to vector<8x2x1xf32>
    %260 = arith.addf %195, %259 : vector<8x2x1xf32>
    %cst_61 = arith.constant 0.000000e+00 : f32
    %261 = vector.broadcast %cst_61 : f32 to vector<8x2x1xf32>
    %262 = arith.maximumf %260, %261 : vector<8x2x1xf32>
    %cst_62 = arith.constant dense<0xFF800000> : vector<2x1xf32>
    %263 = vector.multi_reduction <maximumf>, %262, %cst_62 [0] : vector<8x2x1xf32> to vector<2x1xf32>
    %264 = vector.shape_cast %263 : vector<2x1xf32> to vector<1x2x1xf32>
    %265 = vector.broadcast %264 : vector<1x2x1xf32> to vector<8x2x1xf32>
    %266 = arith.subf %262, %265 : vector<8x2x1xf32>
    %267 = math.exp %266 : vector<8x2x1xf32>
    %cst_63 = arith.constant dense<0.000000e+00> : vector<2x1xf32>
    %268 = vector.multi_reduction <add>, %267, %cst_63 [0] : vector<8x2x1xf32> to vector<2x1xf32>
    %269 = vector.shape_cast %268 : vector<2x1xf32> to vector<1x2x1xf32>
    %270 = tpu.reciprocal %269 {approx = true} : vector<1x2x1xf32> -> vector<1x2x1xf32>
    %271 = vector.broadcast %270 : vector<1x2x1xf32> to vector<8x2x1xf32>
    %272 = arith.mulf %267, %271 : vector<8x2x1xf32>
    %273 = vector.broadcast %272 : vector<8x2x1xf32> to vector<8x2x32xf32>
    %274 = arith.mulf %273, %179 : vector<8x2x32xf32>
    %cst_64 = arith.constant dense<0.000000e+00> : vector<2x32xf32>
    %275 = vector.multi_reduction <add>, %274, %cst_64 [0] : vector<8x2x32xf32> to vector<2x32xf32>
    %276 = tpu.concatenate %275, %243 in 1 : vector<2x32xf32>, vector<2x32xf32> -> vector<2x64xf32>
    %277 = arith.truncf %276 : vector<2x64xf32> to vector<2x64xbf16>
    %cst_65 = arith.constant dense<0.000000e+00> : vector<2x128xf32>
    %278 = tpu.matmul %277, %183, %cst_65 {dimension_numbers = #tpu.dot_dimension_numbers<[1], [0], [0], [1], [0, 0, 1, 1], [], []>} : vector<2x64xbf16>, vector<64x128xbf16>, vector<2x128xf32> -> vector<2x128xf32>
    %279 = vector.broadcast %253 : vector<2x1xf32> to vector<2x128xf32>
    %280 = vector.broadcast %184 : vector<1x128xf32> to vector<2x128xf32>
    %281 = arith.mulf %279, %280 : vector<2x128xf32>
    %282 = arith.addf %278, %281 : vector<2x128xf32>
    %283 = vector.broadcast %185 : vector<1x128xf32> to vector<2x128xf32>
    %284 = arith.addf %282, %283 : vector<2x128xf32>
    %285 = vector.extract_strided_slice %284 {offsets = [0, 0], sizes = [2, 96], strides = [1, 1]} : vector<2x128xf32> to vector<2x96xf32>
    %286 = arith.negf %285 : vector<2x96xf32>
    %287 = math.exp %286 : vector<2x96xf32>
    %cst_66 = arith.constant 1.000000e+00 : f32
    %288 = vector.broadcast %cst_66 : f32 to vector<2x96xf32>
    %289 = arith.addf %288, %287 : vector<2x96xf32>
    %290 = arith.divf %288, %289 : vector<2x96xf32>
    %291 = vector.extract_strided_slice %284 {offsets = [0, 96], sizes = [2, 32], strides = [1, 1]} : vector<2x128xf32> to vector<2x32xf32>
    %292 = math.tanh %291 : vector<2x32xf32>
    %293 = vector.extract_strided_slice %290 {offsets = [0, 0], sizes = [2, 32], strides = [1, 1]} : vector<2x96xf32> to vector<2x32xf32>
    %294 = vector.extract_strided_slice %290 {offsets = [0, 32], sizes = [2, 32], strides = [1, 1]} : vector<2x96xf32> to vector<2x32xf32>
    %295 = vector.extract_strided_slice %290 {offsets = [0, 64], sizes = [2, 32], strides = [1, 1]} : vector<2x96xf32> to vector<2x32xf32>
    %296 = arith.mulf %294, %241 : vector<2x32xf32>
    %297 = arith.mulf %293, %292 : vector<2x32xf32>
    %298 = arith.addf %296, %297 : vector<2x32xf32>
    %299 = math.tanh %298 : vector<2x32xf32>
    %300 = arith.mulf %295, %299 : vector<2x32xf32>
    %301 = vector.broadcast %186 : vector<1x32xf32> to vector<2x32xf32>
    %302 = arith.mulf %300, %301 : vector<2x32xf32>
    %cst_67 = arith.constant dense<0.000000e+00> : vector<2xf32>
    %303 = vector.multi_reduction <add>, %302, %cst_67 [1] : vector<2x32xf32> to vector<2xf32>
    %304 = vector.shape_cast %303 : vector<2xf32> to vector<2x1xf32>
    %305 = vector.broadcast %187 : f32 to vector<2x1xf32>
    %306 = arith.addf %304, %305 : vector<2x1xf32>
    %c1_68 = arith.constant 1 : index
    %307 = memref.load %arg10[%c1_68] : memref<4xi32, #tpu.memory_space<smem>>
    %c0_i32_69 = arith.constant 0 : i32
    %308 = arith.cmpi sgt, %307, %c0_i32_69 : i32
    %309 = vector.extract_strided_slice %188 {offsets = [0, 1], sizes = [2, 1], strides = [1, 1]} : vector<2x4xf32> to vector<2x1xf32>
    %310 = arith.select %308, %309, %306 : vector<2x1xf32>
    %311 = vector.broadcast %180 : vector<1x32xf32> to vector<2x32xf32>
    %312 = arith.mulf %300, %311 : vector<2x32xf32>
    %cst_70 = arith.constant dense<0.000000e+00> : vector<2xf32>
    %313 = vector.multi_reduction <add>, %312, %cst_70 [1] : vector<2x32xf32> to vector<2xf32>
    %314 = vector.shape_cast %313 : vector<2xf32> to vector<2x1xf32>
    %315 = vector.shape_cast %314 : vector<2x1xf32> to vector<1x2x1xf32>
    %316 = vector.broadcast %315 : vector<1x2x1xf32> to vector<8x2x1xf32>
    %317 = arith.addf %195, %316 : vector<8x2x1xf32>
    %cst_71 = arith.constant 0.000000e+00 : f32
    %318 = vector.broadcast %cst_71 : f32 to vector<8x2x1xf32>
    %319 = arith.maximumf %317, %318 : vector<8x2x1xf32>
    %cst_72 = arith.constant dense<0xFF800000> : vector<2x1xf32>
    %320 = vector.multi_reduction <maximumf>, %319, %cst_72 [0] : vector<8x2x1xf32> to vector<2x1xf32>
    %321 = vector.shape_cast %320 : vector<2x1xf32> to vector<1x2x1xf32>
    %322 = vector.broadcast %321 : vector<1x2x1xf32> to vector<8x2x1xf32>
    %323 = arith.subf %319, %322 : vector<8x2x1xf32>
    %324 = math.exp %323 : vector<8x2x1xf32>
    %cst_73 = arith.constant dense<0.000000e+00> : vector<2x1xf32>
    %325 = vector.multi_reduction <add>, %324, %cst_73 [0] : vector<8x2x1xf32> to vector<2x1xf32>
    %326 = vector.shape_cast %325 : vector<2x1xf32> to vector<1x2x1xf32>
    %327 = tpu.reciprocal %326 {approx = true} : vector<1x2x1xf32> -> vector<1x2x1xf32>
    %328 = vector.broadcast %327 : vector<1x2x1xf32> to vector<8x2x1xf32>
    %329 = arith.mulf %324, %328 : vector<8x2x1xf32>
    %330 = vector.broadcast %329 : vector<8x2x1xf32> to vector<8x2x32xf32>
    %331 = arith.mulf %330, %179 : vector<8x2x32xf32>
    %cst_74 = arith.constant dense<0.000000e+00> : vector<2x32xf32>
    %332 = vector.multi_reduction <add>, %331, %cst_74 [0] : vector<8x2x32xf32> to vector<2x32xf32>
    %333 = tpu.concatenate %332, %300 in 1 : vector<2x32xf32>, vector<2x32xf32> -> vector<2x64xf32>
    %334 = arith.truncf %333 : vector<2x64xf32> to vector<2x64xbf16>
    %cst_75 = arith.constant dense<0.000000e+00> : vector<2x128xf32>
    %335 = tpu.matmul %334, %183, %cst_75 {dimension_numbers = #tpu.dot_dimension_numbers<[1], [0], [0], [1], [0, 0, 1, 1], [], []>} : vector<2x64xbf16>, vector<64x128xbf16>, vector<2x128xf32> -> vector<2x128xf32>
    %336 = vector.broadcast %310 : vector<2x1xf32> to vector<2x128xf32>
    %337 = vector.broadcast %184 : vector<1x128xf32> to vector<2x128xf32>
    %338 = arith.mulf %336, %337 : vector<2x128xf32>
    %339 = arith.addf %335, %338 : vector<2x128xf32>
    %340 = vector.broadcast %185 : vector<1x128xf32> to vector<2x128xf32>
    %341 = arith.addf %339, %340 : vector<2x128xf32>
    %342 = vector.extract_strided_slice %341 {offsets = [0, 0], sizes = [2, 96], strides = [1, 1]} : vector<2x128xf32> to vector<2x96xf32>
    %343 = arith.negf %342 : vector<2x96xf32>
    %344 = math.exp %343 : vector<2x96xf32>
    %cst_76 = arith.constant 1.000000e+00 : f32
    %345 = vector.broadcast %cst_76 : f32 to vector<2x96xf32>
    %346 = arith.addf %345, %344 : vector<2x96xf32>
    %347 = arith.divf %345, %346 : vector<2x96xf32>
    %348 = vector.extract_strided_slice %341 {offsets = [0, 96], sizes = [2, 32], strides = [1, 1]} : vector<2x128xf32> to vector<2x32xf32>
    %349 = math.tanh %348 : vector<2x32xf32>
    %350 = vector.extract_strided_slice %347 {offsets = [0, 0], sizes = [2, 32], strides = [1, 1]} : vector<2x96xf32> to vector<2x32xf32>
    %351 = vector.extract_strided_slice %347 {offsets = [0, 32], sizes = [2, 32], strides = [1, 1]} : vector<2x96xf32> to vector<2x32xf32>
    %352 = vector.extract_strided_slice %347 {offsets = [0, 64], sizes = [2, 32], strides = [1, 1]} : vector<2x96xf32> to vector<2x32xf32>
    %353 = arith.mulf %351, %298 : vector<2x32xf32>
    %354 = arith.mulf %350, %349 : vector<2x32xf32>
    %355 = arith.addf %353, %354 : vector<2x32xf32>
    %356 = math.tanh %355 : vector<2x32xf32>
    %357 = arith.mulf %352, %356 : vector<2x32xf32>
    %358 = vector.broadcast %186 : vector<1x32xf32> to vector<2x32xf32>
    %359 = arith.mulf %357, %358 : vector<2x32xf32>
    %cst_77 = arith.constant dense<0.000000e+00> : vector<2xf32>
    %360 = vector.multi_reduction <add>, %359, %cst_77 [1] : vector<2x32xf32> to vector<2xf32>
    %361 = vector.shape_cast %360 : vector<2xf32> to vector<2x1xf32>
    %362 = vector.broadcast %187 : f32 to vector<2x1xf32>
    %363 = arith.addf %361, %362 : vector<2x1xf32>
    %c2_78 = arith.constant 2 : index
    %364 = memref.load %arg10[%c2_78] : memref<4xi32, #tpu.memory_space<smem>>
    %c0_i32_79 = arith.constant 0 : i32
    %365 = arith.cmpi sgt, %364, %c0_i32_79 : i32
    %366 = vector.extract_strided_slice %188 {offsets = [0, 2], sizes = [2, 1], strides = [1, 1]} : vector<2x4xf32> to vector<2x1xf32>
    %367 = arith.select %365, %366, %363 : vector<2x1xf32>
    %368 = vector.broadcast %180 : vector<1x32xf32> to vector<2x32xf32>
    %369 = arith.mulf %357, %368 : vector<2x32xf32>
    %cst_80 = arith.constant dense<0.000000e+00> : vector<2xf32>
    %370 = vector.multi_reduction <add>, %369, %cst_80 [1] : vector<2x32xf32> to vector<2xf32>
    %371 = vector.shape_cast %370 : vector<2xf32> to vector<2x1xf32>
    %372 = vector.shape_cast %371 : vector<2x1xf32> to vector<1x2x1xf32>
    %373 = vector.broadcast %372 : vector<1x2x1xf32> to vector<8x2x1xf32>
    %374 = arith.addf %195, %373 : vector<8x2x1xf32>
    %cst_81 = arith.constant 0.000000e+00 : f32
    %375 = vector.broadcast %cst_81 : f32 to vector<8x2x1xf32>
    %376 = arith.maximumf %374, %375 : vector<8x2x1xf32>
    %cst_82 = arith.constant dense<0xFF800000> : vector<2x1xf32>
    %377 = vector.multi_reduction <maximumf>, %376, %cst_82 [0] : vector<8x2x1xf32> to vector<2x1xf32>
    %378 = vector.shape_cast %377 : vector<2x1xf32> to vector<1x2x1xf32>
    %379 = vector.broadcast %378 : vector<1x2x1xf32> to vector<8x2x1xf32>
    %380 = arith.subf %376, %379 : vector<8x2x1xf32>
    %381 = math.exp %380 : vector<8x2x1xf32>
    %cst_83 = arith.constant dense<0.000000e+00> : vector<2x1xf32>
    %382 = vector.multi_reduction <add>, %381, %cst_83 [0] : vector<8x2x1xf32> to vector<2x1xf32>
    %383 = vector.shape_cast %382 : vector<2x1xf32> to vector<1x2x1xf32>
    %384 = tpu.reciprocal %383 {approx = true} : vector<1x2x1xf32> -> vector<1x2x1xf32>
    %385 = vector.broadcast %384 : vector<1x2x1xf32> to vector<8x2x1xf32>
    %386 = arith.mulf %381, %385 : vector<8x2x1xf32>
    %387 = vector.broadcast %386 : vector<8x2x1xf32> to vector<8x2x32xf32>
    %388 = arith.mulf %387, %179 : vector<8x2x32xf32>
    %cst_84 = arith.constant dense<0.000000e+00> : vector<2x32xf32>
    %389 = vector.multi_reduction <add>, %388, %cst_84 [0] : vector<8x2x32xf32> to vector<2x32xf32>
    %390 = tpu.concatenate %389, %357 in 1 : vector<2x32xf32>, vector<2x32xf32> -> vector<2x64xf32>
    %391 = arith.truncf %390 : vector<2x64xf32> to vector<2x64xbf16>
    %cst_85 = arith.constant dense<0.000000e+00> : vector<2x128xf32>
    %392 = tpu.matmul %391, %183, %cst_85 {dimension_numbers = #tpu.dot_dimension_numbers<[1], [0], [0], [1], [0, 0, 1, 1], [], []>} : vector<2x64xbf16>, vector<64x128xbf16>, vector<2x128xf32> -> vector<2x128xf32>
    %393 = vector.broadcast %367 : vector<2x1xf32> to vector<2x128xf32>
    %394 = vector.broadcast %184 : vector<1x128xf32> to vector<2x128xf32>
    %395 = arith.mulf %393, %394 : vector<2x128xf32>
    %396 = arith.addf %392, %395 : vector<2x128xf32>
    %397 = vector.broadcast %185 : vector<1x128xf32> to vector<2x128xf32>
    %398 = arith.addf %396, %397 : vector<2x128xf32>
    %399 = vector.extract_strided_slice %398 {offsets = [0, 0], sizes = [2, 96], strides = [1, 1]} : vector<2x128xf32> to vector<2x96xf32>
    %400 = arith.negf %399 : vector<2x96xf32>
    %401 = math.exp %400 : vector<2x96xf32>
    %cst_86 = arith.constant 1.000000e+00 : f32
    %402 = vector.broadcast %cst_86 : f32 to vector<2x96xf32>
    %403 = arith.addf %402, %401 : vector<2x96xf32>
    %404 = arith.divf %402, %403 : vector<2x96xf32>
    %405 = vector.extract_strided_slice %398 {offsets = [0, 96], sizes = [2, 32], strides = [1, 1]} : vector<2x128xf32> to vector<2x32xf32>
    %406 = math.tanh %405 : vector<2x32xf32>
    %407 = vector.extract_strided_slice %404 {offsets = [0, 0], sizes = [2, 32], strides = [1, 1]} : vector<2x96xf32> to vector<2x32xf32>
    %408 = vector.extract_strided_slice %404 {offsets = [0, 32], sizes = [2, 32], strides = [1, 1]} : vector<2x96xf32> to vector<2x32xf32>
    %409 = vector.extract_strided_slice %404 {offsets = [0, 64], sizes = [2, 32], strides = [1, 1]} : vector<2x96xf32> to vector<2x32xf32>
    %410 = arith.mulf %408, %355 : vector<2x32xf32>
    %411 = arith.mulf %407, %406 : vector<2x32xf32>
    %412 = arith.addf %410, %411 : vector<2x32xf32>
    %413 = math.tanh %412 : vector<2x32xf32>
    %414 = arith.mulf %409, %413 : vector<2x32xf32>
    %415 = vector.broadcast %186 : vector<1x32xf32> to vector<2x32xf32>
    %416 = arith.mulf %414, %415 : vector<2x32xf32>
    %cst_87 = arith.constant dense<0.000000e+00> : vector<2xf32>
    %417 = vector.multi_reduction <add>, %416, %cst_87 [1] : vector<2x32xf32> to vector<2xf32>
    %418 = vector.shape_cast %417 : vector<2xf32> to vector<2x1xf32>
    %419 = vector.broadcast %187 : f32 to vector<2x1xf32>
    %420 = arith.addf %418, %419 : vector<2x1xf32>
    %421 = tpu.concatenate %249, %306, %363, %420 in 1 : vector<2x1xf32>, vector<2x1xf32>, vector<2x1xf32>, vector<2x1xf32> -> vector<2x4xf32>
    %c0_88 = arith.constant 0 : index
    %c0_89 = arith.constant 0 : index
    %422 = vector.load %arg11[%c0_88, %c0_89] : memref<2x4xf32, #tpu.memory_space<vmem>>, vector<2x4xf32>
    tpu.vector_store %arg11[%c0_88, %c0_89], %421 {strides = array<i32>} : memref<2x4xf32, #tpu.memory_space<vmem>>, vector<2x4xf32>,
    return
  }
}

</mosaic_0001>

<llo_original>
// kernel: seq2seq_forward.1
$region0: #{seq2seq_forward.1}
  #allocation0 [shape = 'u32[]', space=smem, size = 0x4, offset = 0x4, fixed_abs, tag = 'smem constant byte address 0x4 - core index']
  #allocation1 [shape = 'u32[144,128]{1,0:T(1,128)}', space=vmem, size = 0x12000, scoped, tag = 'internal scratch']
  #allocation2 [shape = 'f32[1]{0:T(128)S(6)}', space=smem, size = 0x200, scoped, tag = 'scoped memory for seq2seq_forward.1']
  #allocation3 [shape = 'f32[1]{0:T(128)S(6)}', space=smem, size = 0x200, scoped, tag = 'scoped memory for seq2seq_forward.1']
  %s0 = inlined_call_operand.vmem [shape: f32[8,2,128], index: 0, kind: input, shape index: {}]
  %s1 = inlined_call_operand.vmem [shape: bf16[32,128], index: 1, kind: input, shape index: {}]
  %s2 = inlined_call_operand.vmem [shape: f32[1,64], index: 2, kind: input, shape index: {}]
  %s3 = inlined_call_operand.vmem [shape: bf16[64,128], index: 3, kind: input, shape index: {}]
  %s4 = inlined_call_operand.vmem [shape: f32[1,128], index: 4, kind: input, shape index: {}]
  %s5 = inlined_call_operand.vmem [shape: f32[1,128], index: 5, kind: input, shape index: {}]
  %s6 = inlined_call_operand.vmem [shape: f32[1,32], index: 6, kind: input, shape index: {}]
  %s7 = inlined_call_operand.vmem [shape: f32[2,4], index: 7, kind: input, shape index: {}]
  %s8 = inlined_call_operand.<no memory space> [shape: f32[1], index: 8, kind: input, shape index: {}]
  %s9 = inlined_call_operand.<no memory space> [shape: f32[1], index: 9, kind: input, shape index: {}]
  %s10 = inlined_call_operand.vmem [shape: s32[4], index: 10, kind: input, shape index: {}]
  %s11 = inlined_call_operand.hbm [shape: f32[2,4], index: 11, kind: output, shape index: {}]
  %s12 = sld [smem:[#allocation0]]
  $region58: #{seq2seq_forward.1} parent=0
    _
  %s14 = ssub.s32 1, %s12
  %s15 = scalar_select 0, %s14, %s12
  %16 = sst [smem:[#allocation2]] %s8
  %17 = sst [smem:[#allocation3]] %s9
  $region1: #{seq2seq_forward.1} parent=0
    #allocation4 [shape = 'u8[512]{0}', space=smem, size = 0x200, scoped, tag = 'input window, operand 10, single buffered']
    #allocation5 [shape = 's32[1]{0}', space=sflag, size = 0x4, scoped, tag = 'scoped memory for seq2seq_forward.1']
    #allocation6 [shape = 's32[1]{0}', space=sflag, size = 0x4, scoped, tag = 'scoped memory for seq2seq_forward.1']
    #allocation7 [shape = 'u8[1024]{0}', space=vmem, size = 0x400, scoped, tag = 'output window, operand 0, single buffered']
    %18 = vsyncpa [#allocation6], 0
    %19 = vsyncpa [#allocation5], 0
    // Predicated region
    $region2: #{seq2seq_forward.1} parent=1 // pred_check
      _
    $region3: #{seq2seq_forward.1} parent=1 // pred_check_branch
      %21 = sbr.rel (0) target = $region5
    $region4: #{seq2seq_forward.1} parent=1 // pred_region
      _
    $region5: #{seq2seq_forward.1} parent=1 // pred_fallthru
      _
    // Predicated region
    $region6: #{seq2seq_forward.1} parent=1 // pred_check
      _
    $region7: #{seq2seq_forward.1} parent=1 // pred_check_branch
      %23 = sbr.rel (0) target = $region9
    $region8: #{seq2seq_forward.1} parent=1 // pred_region
      _
    $region9: #{seq2seq_forward.1} parent=1 // pred_fallthru
      _
    // Predicated region
    $region10: #{seq2seq_forward.1} parent=1 // pred_check
      _
    $region11: #{seq2seq_forward.1} parent=1 // pred_check_branch
      %25 = sbr.rel (0) target = $region13
    $region12: #{seq2seq_forward.1} parent=1 // pred_region
      _
    $region13: #{seq2seq_forward.1} parent=1 // pred_fallthru
      _
    // Predicated region
    $region14: #{seq2seq_forward.1} parent=1 // pred_check
      _
    $region15: #{seq2seq_forward.1} parent=1 // pred_check_branch
      %27 = sbr.rel (0) target = $region17
    $region16: #{seq2seq_forward.1} parent=1 // pred_region
      _
    $region17: #{seq2seq_forward.1} parent=1 // pred_fallthru
      _
    // Predicated region
    $region18: #{seq2seq_forward.1} parent=1 // pred_check
      _
    $region19: #{seq2seq_forward.1} parent=1 // pred_check_branch
      %29 = sbr.rel (0) target = $region21
    $region20: #{seq2seq_forward.1} parent=1 // pred_region
      _
    $region21: #{seq2seq_forward.1} parent=1 // pred_fallthru
      _
    // Predicated region
    $region22: #{seq2seq_forward.1} parent=1 // pred_check
      _
    $region23: #{seq2seq_forward.1} parent=1 // pred_check_branch
      %31 = sbr.rel (0) target = $region25
    $region24: #{seq2seq_forward.1} parent=1 // pred_region
      _
    $region25: #{seq2seq_forward.1} parent=1 // pred_fallthru
      _
    // Predicated region
    $region26: #{seq2seq_forward.1} parent=1 // pred_check
      _
    $region27: #{seq2seq_forward.1} parent=1 // pred_check_branch
      %33 = sbr.rel (0) target = $region29
    $region28: #{seq2seq_forward.1} parent=1 // pred_region
      _
    $region29: #{seq2seq_forward.1} parent=1 // pred_fallthru
      _
    // Predicated region
    $region30: #{seq2seq_forward.1} parent=1 // pred_check
      _
    $region31: #{seq2seq_forward.1} parent=1 // pred_check_branch
      %35 = sbr.rel (0) target = $region33
    $region32: #{seq2seq_forward.1} parent=1 // pred_region
      _
    $region33: #{seq2seq_forward.1} parent=1 // pred_fallthru
      _
    // Predicated region
    $region34: #{seq2seq_forward.1} parent=1 // pred_check
      _
    $region35: #{seq2seq_forward.1} parent=1 // pred_check_branch
      %37 = sbr.rel (0) target = $region37
    $region36: #{seq2seq_forward.1} parent=1 // pred_region
      _
    $region37: #{seq2seq_forward.1} parent=1 // pred_fallthru
      _
    // Predicated region
    $region38: #{seq2seq_forward.1} parent=1 // pred_check
      _
    $region39: #{seq2seq_forward.1} parent=1 // pred_check_branch
      %39 = sbr.rel (0) target = $region41
    $region40: #{seq2seq_forward.1} parent=1 // pred_region
      _
    $region41: #{seq2seq_forward.1} parent=1 // pred_fallthru
      _
    // Predicated region
    $region42: #{seq2seq_forward.1} parent=1 // pred_check
      _
    $region43: #{seq2seq_forward.1} parent=1 // pred_check_branch
      %41 = sbr.rel (0) target = $region45
    $region44: #{seq2seq_forward.1} parent=1 // pred_region
      %s43 = ssub.s32 16, 16
      %44 = vsyncadd [#allocation6], %s43
      %s46 = sshll.u32 %s10, 4
      %s47 = int_to_ptr.vmem [resolvable:$true] %s46
      %49 = dma.vmem_to_smem %s47, 16, [#allocation4], [#allocation6]
    $region45: #{seq2seq_forward.1} parent=1 // pred_fallthru
      _
    // Predicated region
    $region46: #{seq2seq_forward.1} parent=1 // pred_check
      _
    $region47: #{seq2seq_forward.1} parent=1 // pred_check_branch
      %51 = sbr.rel (0) target = $region49
    $region48: #{seq2seq_forward.1} parent=1 // pred_region
      %52 = dma.done [#allocation6], 16
    $region49: #{seq2seq_forward.1} parent=1 // pred_fallthru
      _
    %53 = sfence
    %v55 = vld [vmem:[%s1] sm:$0xf]
    %v56 = vld [vmem:[%s1 + $0x4] sm:$0xf]
    %v57 = vld [vmem:[%s1 + $0x8] sm:$0xf]
    %v58 = vld [vmem:[%s1 + $0xc] sm:$0xf]
    %v59 = vld [vmem:[%s0] sm:$0x3]
    %v64 = vunpack.c.l.b16 %v55
    %v65 = vunpack.c.l.b16 %v56
    %v66 = vunpack.c.l.b16 %v57
    %v67 = vunpack.c.l.b16 %v58
    %v68 = vpack.c.b16 %v65, %v64
    %v69 = vpack.c.b16 %v67, %v66
    %vm72 = vcmask 261120
    %v74 = vsel %vm72, 0, 0
    %76 = vmatprep.subr.bf16.mxu0 0
    %77 = vmatpush1.bf16.msra.mxu0 %v68
    %78 = vmatprep.subr.bf16.mxu0 0
    %79 = vmatpush1.bf16.msra.mxu0 %v69
    %80 = vmatprep.subr.bf16.mxu0 0
    %81 = vmatpush1.bf16.msra.mxu0 0
    %82 = vmatprep.subr.bf16.mxu0 0
    %83 = vmatpush1.bf16.msra.mxu0 0
    %84 = vmatprep.subr.bf16.mxu0 0
    %85 = vmatpush1.bf16.msra.mxu0 0
    %86 = vmatprep.subr.bf16.mxu0 0
    %87 = vmatpush1.bf16.msra.mxu0 0
    %88 = vmatprep.subr.bf16.mxu0 0
    %89 = vmatpush1.bf16.msra.mxu0 0
    %90 = vmatprep.subr.bf16.mxu0 0
    %91 = vmatpush1.bf16.msra.mxu0 0
    %92 = vmatprep.subr.bf16.mxu0 0
    %93 = vmatpush1.bf16.msra.mxu0 0
    %94 = vmatprep.subr.bf16.mxu0 0
    %95 = vmatpush1.bf16.msra.mxu0 0
    %96 = vmatprep.subr.bf16.mxu0 0
    %97 = vmatpush1.bf16.msra.mxu0 0
    %98 = vmatprep.subr.bf16.mxu0 0
    %99 = vmatpush1.bf16.msra.mxu0 0
    %100 = vmatprep.subr.bf16.mxu0 0
    %101 = vmatpush1.bf16.msra.mxu0 0
    %102 = vmatprep.subr.bf16.mxu0 0
    %103 = vmatpush1.bf16.msra.mxu0 0
    %104 = vmatprep.subr.bf16.mxu0 0
    %105 = vmatpush1.bf16.msra.mxu0 0
    %106 = vmatprep.subr.bf16.mxu0 0
    %107 = vmatpush1.bf16.msra.mxu0 0
    %108 = vmatprep.mubr.bf16.mxu0 0
    %109 = vmatmul.mubr.bf16.gmra.mrb[0].mxu0 %v74
    %v110 = vpop.f32.mrb[0].mxu0
    %v111 = vadd.f32 0.0, %v110
    %v112 = vpop.f32.mrb[0].mxu0
    %v113 = vpop.f32.mrb[0].mxu0
    %v114 = vpop.f32.mrb[0].mxu0
    %115 = vdwg.mxu0
    %v116 = vadd.f32 %v59, %v111
    %v117 = vxor.u32 %v116, 2147483648
    %v118 = vmul.f32 %v117, 1.442695
    %v119 = vpow.pop %v118
    %v120 = vadd.f32 %v119, 1.0
    %v121 = vrcp.pop %v120
    %v122 = vmul.f32 1.0, %v121
    %v123 = vtanh.pop %v116
    %v124 = vmul.f32 %v122, 0.0
    %126 = vrot.lane.b32.xlu0 %v123, 32
    %v127 = vpop.permute.xlu0 %126
    %v129 = vmul.f32 %v122, %v127
    %131 = vrot.lane.b32.xlu0 %v129, 32
    %v132 = vpop.permute.xlu0 %131
    %v134 = vadd.f32 %v124, %v132
    %v135 = vtanh.pop %v134
    %137 = vrot.lane.b32.xlu0 %v135, 32
    %v138 = vpop.permute.xlu0 %137
    %v140 = vmul.f32 %v122, %v138
    %s141 = scalar_lea.vmem %s0, 2
    %v142 = vld [vmem:[%s141] sm:$0x3]
    %v143 = vpack.c.bf16 %v140, %v140
    %145 = vrot.lane.b32.xlu0 %v143, 64
    %v146 = vpop.permute.xlu0 %145
    %v148 = vsel %vm72, %v146, 0
    %150 = vmatprep.subr.bf16.mxu0 0
    %151 = vmatpush1.bf16.msra.mxu0 %v68
    %152 = vmatprep.subr.bf16.mxu0 0
    %153 = vmatpush1.bf16.msra.mxu0 %v69
    %154 = vmatprep.subr.bf16.mxu0 0
    %155 = vmatpush1.bf16.msra.mxu0 0
    %156 = vmatprep.subr.bf16.mxu0 0
    %157 = vmatpush1.bf16.msra.mxu0 0
    %158 = vmatprep.subr.bf16.mxu0 0
    %159 = vmatpush1.bf16.msra.mxu0 0
    %160 = vmatprep.subr.bf16.mxu0 0
    %161 = vmatpush1.bf16.msra.mxu0 0
    %162 = vmatprep.subr.bf16.mxu0 0
    %163 = vmatpush1.bf16.msra.mxu0 0
    %164 = vmatprep.subr.bf16.mxu0 0
    %165 = vmatpush1.bf16.msra.mxu0 0
    %166 = vmatprep.subr.bf16.mxu0 0
    %167 = vmatpush1.bf16.msra.mxu0 0
    %168 = vmatprep.subr.bf16.mxu0 0
    %169 = vmatpush1.bf16.msra.mxu0 0
    %170 = vmatprep.subr.bf16.mxu0 0
    %171 = vmatpush1.bf16.msra.mxu0 0
    %172 = vmatprep.subr.bf16.mxu0 0
    %173 = vmatpush1.bf16.msra.mxu0 0
    %174 = vmatprep.subr.bf16.mxu0 0
    %175 = vmatpush1.bf16.msra.mxu0 0
    %176 = vmatprep.subr.bf16.mxu0 0
    %177 = vmatpush1.bf16.msra.mxu0 0
    %178 = vmatprep.subr.bf16.mxu0 0
    %179 = vmatpush1.bf16.msra.mxu0 0
    %180 = vmatprep.subr.bf16.mxu0 0
    %181 = vmatpush1.bf16.msra.mxu0 0
    %182 = vmatprep.mubr.bf16.mxu0 0
    %183 = vmatmul.mubr.bf16.gmra.mrb[0].mxu0 %v148
    %v184 = vpop.f32.mrb[0].mxu0
    %v185 = vadd.f32 0.0, %v184
    %v186 = vpop.f32.mrb[0].mxu0
    %v187 = vpop.f32.mrb[0].mxu0
    %v188 = vpop.f32.mrb[0].mxu0
    %189 = vdwg.mxu0
    %v190 = vadd.f32 %v142, %v185
    %v191 = vxor.u32 %v190, 2147483648
    %v192 = vmul.f32 %v191, 1.442695
    %v193 = vpow.pop %v192
    %v194 = vadd.f32 %v193, 1.0
    %v195 = vrcp.pop %v194
    %v196 = vmul.f32 1.0, %v195
    %v197 = vtanh.pop %v190
    %v198 = vmul.f32 %v196, %v134
    %200 = vrot.lane.b32.xlu0 %v197, 32
    %v201 = vpop.permute.xlu0 %200
    %v203 = vmul.f32 %v196, %v201
    %205 = vrot.lane.b32.xlu0 %v203, 32
    %v206 = vpop.permute.xlu0 %205
    %v208 = vadd.f32 %v198, %v206
    %v209 = vtanh.pop %v208
    %211 = vrot.lane.b32.xlu0 %v209, 32
    %v212 = vpop.permute.xlu0 %211
    %v214 = vmul.f32 %v196, %v212
    %s215 = scalar_lea.vmem %s0, 4
    %v216 = vld [vmem:[%s215] sm:$0x3]
    %v217 = vpack.c.bf16 %v214, %v214
    %219 = vrot.lane.b32.xlu0 %v217, 64
    %v220 = vpop.permute.xlu0 %219
    %v222 = vsel %vm72, %v220, 0
    %224 = vmatprep.subr.bf16.mxu0 0
    %225 = vmatpush1.bf16.msra.mxu0 %v68
    %226 = vmatprep.subr.bf16.mxu0 0
    %227 = vmatpush1.bf16.msra.mxu0 %v69
    %228 = vmatprep.subr.bf16.mxu0 0
    %229 = vmatpush1.bf16.msra.mxu0 0
    %230 = vmatprep.subr.bf16.mxu0 0
    %231 = vmatpush1.bf16.msra.mxu0 0
    %232 = vmatprep.subr.bf16.mxu0 0
    %233 = vmatpush1.bf16.msra.mxu0 0
    %234 = vmatprep.subr.bf16.mxu0 0
    %235 = vmatpush1.bf16.msra.mxu0 0
    %236 = vmatprep.subr.bf16.mxu0 0
    %237 = vmatpush1.bf16.msra.mxu0 0
    %238 = vmatprep.subr.bf16.mxu0 0
    %239 = vmatpush1.bf16.msra.mxu0 0
    %240 = vmatprep.subr.bf16.mxu0 0
    %241 = vmatpush1.bf16.msra.mxu0 0
    %242 = vmatprep.subr.bf16.mxu0 0
    %243 = vmatpush1.bf16.msra.mxu0 0
    %244 = vmatprep.subr.bf16.mxu0 0
    %245 = vmatpush1.bf16.msra.mxu0 0
    %246 = vmatprep.subr.bf16.mxu0 0
    %247 = vmatpush1.bf16.msra.mxu0 0
    %248 = vmatprep.subr.bf16.mxu0 0
    %249 = vmatpush1.bf16.msra.mxu0 0
    %250 = vmatprep.subr.bf16.mxu0 0
    %251 = vmatpush1.bf16.msra.mxu0 0
    %252 = vmatprep.subr.bf16.mxu0 0
    %253 = vmatpush1.bf16.msra.mxu0 0
    %254 = vmatprep.subr.bf16.mxu0 0
    %255 = vmatpush1.bf16.msra.mxu0 0
    %256 = vmatprep.mubr.bf16.mxu0 0
    %257 = vmatmul.mubr.bf16.gmra.mrb[0].mxu0 %v222
    %v258 = vpop.f32.mrb[0].mxu0
    %v259 = vadd.f32 0.0, %v258
    %v260 = vpop.f32.mrb[0].mxu0
    %v261 = vpop.f32.mrb[0].mxu0
    %v262 = vpop.f32.mrb[0].mxu0
    %263 = vdwg.mxu0
    %v264 = vadd.f32 %v216, %v259
    %v265 = vxor.u32 %v264, 2147483648
    %v266 = vmul.f32 %v265, 1.442695
    %v267 = vpow.pop %v266
    %v268 = vadd.f32 %v267, 1.0
    %v269 = vrcp.pop %v268
    %v270 = vmul.f32 1.0, %v269
    %v271 = vtanh.pop %v264
    %v272 = vmul.f32 %v270, %v208
    %274 = vrot.lane.b32.xlu0 %v271, 32
    %v275 = vpop.permute.xlu0 %274
    %v277 = vmul.f32 %v270, %v275
    %279 = vrot.lane.b32.xlu0 %v277, 32
    %v280 = vpop.permute.xlu0 %279
    %v282 = vadd.f32 %v272, %v280
    %v283 = vtanh.pop %v282
    %285 = vrot.lane.b32.xlu0 %v283, 32
    %v286 = vpop.permute.xlu0 %285
    %v288 = vmul.f32 %v270, %v286
    %s289 = scalar_lea.vmem %s0, 6
    %v290 = vld [vmem:[%s289] sm:$0x3]
    %v291 = vpack.c.bf16 %v288, %v288
    %293 = vrot.lane.b32.xlu0 %v291, 64
    %v294 = vpop.permute.xlu0 %293
    %v296 = vsel %vm72, %v294, 0
    %298 = vmatprep.subr.bf16.mxu0 0
    %299 = vmatpush1.bf16.msra.mxu0 %v68
    %300 = vmatprep.subr.bf16.mxu0 0
    %301 = vmatpush1.bf16.msra.mxu0 %v69
    %302 = vmatprep.subr.bf16.mxu0 0
    %303 = vmatpush1.bf16.msra.mxu0 0
    %304 = vmatprep.subr.bf16.mxu0 0
    %305 = vmatpush1.bf16.msra.mxu0 0
    %306 = vmatprep.subr.bf16.mxu0 0
    %307 = vmatpush1.bf16.msra.mxu0 0
    %308 = vmatprep.subr.bf16.mxu0 0
    %309 = vmatpush1.bf16.msra.mxu0 0
    %310 = vmatprep.subr.bf16.mxu0 0
    %311 = vmatpush1.bf16.msra.mxu0 0
    %312 = vmatprep.subr.bf16.mxu0 0
    %313 = vmatpush1.bf16.msra.mxu0 0
    %314 = vmatprep.subr.bf16.mxu0 0
    %315 = vmatpush1.bf16.msra.mxu0 0
    %316 = vmatprep.subr.bf16.mxu0 0
    %317 = vmatpush1.bf16.msra.mxu0 0
    %318 = vmatprep.subr.bf16.mxu0 0
    %319 = vmatpush1.bf16.msra.mxu0 0
    %320 = vmatprep.subr.bf16.mxu0 0
    %321 = vmatpush1.bf16.msra.mxu0 0
    %322 = vmatprep.subr.bf16.mxu0 0
    %323 = vmatpush1.bf16.msra.mxu0 0
    %324 = vmatprep.subr.bf16.mxu0 0
    %325 = vmatpush1.bf16.msra.mxu0 0
    %326 = vmatprep.subr.bf16.mxu0 0
    %327 = vmatpush1.bf16.msra.mxu0 0
    %328 = vmatprep.subr.bf16.mxu0 0
    %329 = vmatpush1.bf16.msra.mxu0 0
    %330 = vmatprep.mubr.bf16.mxu0 0
    %331 = vmatmul.mubr.bf16.gmra.mrb[0].mxu0 %v296
    %v332 = vpop.f32.mrb[0].mxu0
    %v333 = vadd.f32 0.0, %v332
    %v334 = vpop.f32.mrb[0].mxu0
    %v335 = vpop.f32.mrb[0].mxu0
    %v336 = vpop.f32.mrb[0].mxu0
    %337 = vdwg.mxu0
    %v338 = vadd.f32 %v290, %v333
    %v339 = vxor.u32 %v338, 2147483648
    %v340 = vmul.f32 %v339, 1.442695
    %v341 = vpow.pop %v340
    %v342 = vadd.f32 %v341, 1.0
    %v343 = vrcp.pop %v342
    %v344 = vmul.f32 1.0, %v343
    %v345 = vtanh.pop %v338
    %v346 = vmul.f32 %v344, %v282
    %348 = vrot.lane.b32.xlu0 %v345, 32
    %v349 = vpop.permute.xlu0 %348
    %v351 = vmul.f32 %v344, %v349
    %353 = vrot.lane.b32.xlu0 %v351, 32
    %v354 = vpop.permute.xlu0 %353
    %v356 = vadd.f32 %v346, %v354
    %v357 = vtanh.pop %v356
    %359 = vrot.lane.b32.xlu0 %v357, 32
    %v360 = vpop.permute.xlu0 %359
    %v362 = vmul.f32 %v344, %v360
    %s363 = scalar_lea.vmem %s0, 8
    %v364 = vld [vmem:[%s363] sm:$0x3]
    %v365 = vpack.c.bf16 %v362, %v362
    %367 = vrot.lane.b32.xlu0 %v365, 64
    %v368 = vpop.permute.xlu0 %367
    %v370 = vsel %vm72, %v368, 0
    %372 = vmatprep.subr.bf16.mxu0 0
    %373 = vmatpush1.bf16.msra.mxu0 %v68
    %374 = vmatprep.subr.bf16.mxu0 0
    %375 = vmatpush1.bf16.msra.mxu0 %v69
    %376 = vmatprep.subr.bf16.mxu0 0
    %377 = vmatpush1.bf16.msra.mxu0 0
    %378 = vmatprep.subr.bf16.mxu0 0
    %379 = vmatpush1.bf16.msra.mxu0 0
    %380 = vmatprep.subr.bf16.mxu0 0
    %381 = vmatpush1.bf16.msra.mxu0 0
    %382 = vmatprep.subr.bf16.mxu0 0
    %383 = vmatpush1.bf16.msra.mxu0 0
    %384 = vmatprep.subr.bf16.mxu0 0
    %385 = vmatpush1.bf16.msra.mxu0 0
    %386 = vmatprep.subr.bf16.mxu0 0
    %387 = vmatpush1.bf16.msra.mxu0 0
    %388 = vmatprep.subr.bf16.mxu0 0
    %389 = vmatpush1.bf16.msra.mxu0 0
    %390 = vmatprep.subr.bf16.mxu0 0
    %391 = vmatpush1.bf16.msra.mxu0 0
    %392 = vmatprep.subr.bf16.mxu0 0
    %393 = vmatpush1.bf16.msra.mxu0 0
    %394 = vmatprep.subr.bf16.mxu0 0
    %395 = vmatpush1.bf16.msra.mxu0 0
    %396 = vmatprep.subr.bf16.mxu0 0
    %397 = vmatpush1.bf16.msra.mxu0 0
    %398 = vmatprep.subr.bf16.mxu0 0
    %399 = vmatpush1.bf16.msra.mxu0 0
    %400 = vmatprep.subr.bf16.mxu0 0
    %401 = vmatpush1.bf16.msra.mxu0 0
    %402 = vmatprep.subr.bf16.mxu0 0
    %403 = vmatpush1.bf16.msra.mxu0 0
    %404 = vmatprep.mubr.bf16.mxu0 0
    %405 = vmatmul.mubr.bf16.gmra.mrb[0].mxu0 %v370
    %v406 = vpop.f32.mrb[0].mxu0
    %v407 = vadd.f32 0.0, %v406
    %v408 = vpop.f32.mrb[0].mxu0
    %v409 = vpop.f32.mrb[0].mxu0
    %v410 = vpop.f32.mrb[0].mxu0
    %411 = vdwg.mxu0
    %v412 = vadd.f32 %v364, %v407
    %v413 = vxor.u32 %v412, 2147483648
    %v414 = vmul.f32 %v413, 1.442695
    %v415 = vpow.pop %v414
    %v416 = vadd.f32 %v415, 1.0
    %v417 = vrcp.pop %v416
    %v418 = vmul.f32 1.0, %v417
    %v419 = vtanh.pop %v412
    %v420 = vmul.f32 %v418, %v356
    %422 = vrot.lane.b32.xlu0 %v419, 32
    %v423 = vpop.permute.xlu0 %422
    %v425 = vmul.f32 %v418, %v423
    %427 = vrot.lane.b32.xlu0 %v425, 32
    %v428 = vpop.permute.xlu0 %427
    %v430 = vadd.f32 %v420, %v428
    %v431 = vtanh.pop %v430
    %433 = vrot.lane.b32.xlu0 %v431, 32
    %v434 = vpop.permute.xlu0 %433
    %v436 = vmul.f32 %v418, %v434
    %s437 = scalar_lea.vmem %s0, 10
    %v438 = vld [vmem:[%s437] sm:$0x3]
    %v439 = vpack.c.bf16 %v436, %v436
    %441 = vrot.lane.b32.xlu0 %v439, 64
    %v442 = vpop.permute.xlu0 %441
    %v444 = vsel %vm72, %v442, 0
    %446 = vmatprep.subr.bf16.mxu0 0
    %447 = vmatpush1.bf16.msra.mxu0 %v68
    %448 = vmatprep.subr.bf16.mxu0 0
    %449 = vmatpush1.bf16.msra.mxu0 %v69
    %450 = vmatprep.subr.bf16.mxu0 0
    %451 = vmatpush1.bf16.msra.mxu0 0
    %452 = vmatprep.subr.bf16.mxu0 0
    %453 = vmatpush1.bf16.msra.mxu0 0
    %454 = vmatprep.subr.bf16.mxu0 0
    %455 = vmatpush1.bf16.msra.mxu0 0
    %456 = vmatprep.subr.bf16.mxu0 0
    %457 = vmatpush1.bf16.msra.mxu0 0
    %458 = vmatprep.subr.bf16.mxu0 0
    %459 = vmatpush1.bf16.msra.mxu0 0
    %460 = vmatprep.subr.bf16.mxu0 0
    %461 = vmatpush1.bf16.msra.mxu0 0
    %462 = vmatprep.subr.bf16.mxu0 0
    %463 = vmatpush1.bf16.msra.mxu0 0
    %464 = vmatprep.subr.bf16.mxu0 0
    %465 = vmatpush1.bf16.msra.mxu0 0
    %466 = vmatprep.subr.bf16.mxu0 0
    %467 = vmatpush1.bf16.msra.mxu0 0
    %468 = vmatprep.subr.bf16.mxu0 0
    %469 = vmatpush1.bf16.msra.mxu0 0
    %470 = vmatprep.subr.bf16.mxu0 0
    %471 = vmatpush1.bf16.msra.mxu0 0
    %472 = vmatprep.subr.bf16.mxu0 0
    %473 = vmatpush1.bf16.msra.mxu0 0
    %474 = vmatprep.subr.bf16.mxu0 0
    %475 = vmatpush1.bf16.msra.mxu0 0
    %476 = vmatprep.subr.bf16.mxu0 0
    %477 = vmatpush1.bf16.msra.mxu0 0
    %478 = vmatprep.mubr.bf16.mxu0 0
    %479 = vmatmul.mubr.bf16.gmra.mrb[0].mxu0 %v444
    %v480 = vpop.f32.mrb[0].mxu0
    %v481 = vadd.f32 0.0, %v480
    %v482 = vpop.f32.mrb[0].mxu0
    %v483 = vpop.f32.mrb[0].mxu0
    %v484 = vpop.f32.mrb[0].mxu0
    %485 = vdwg.mxu0
    %v486 = vadd.f32 %v438, %v481
    %v487 = vxor.u32 %v486, 2147483648
    %v488 = vmul.f32 %v487, 1.442695
    %v489 = vpow.pop %v488
    %v490 = vadd.f32 %v489, 1.0
    %v491 = vrcp.pop %v490
    %v492 = vmul.f32 1.0, %v491
    %v493 = vtanh.pop %v486
    %v494 = vmul.f32 %v492, %v430
    %496 = vrot.lane.b32.xlu0 %v493, 32
    %v497 = vpop.permute.xlu0 %496
    %v499 = vmul.f32 %v492, %v497
    %501 = vrot.lane.b32.xlu0 %v499, 32
    %v502 = vpop.permute.xlu0 %501
    %v504 = vadd.f32 %v494, %v502
    %v505 = vtanh.pop %v504
    %507 = vrot.lane.b32.xlu0 %v505, 32
    %v508 = vpop.permute.xlu0 %507
    %v510 = vmul.f32 %v492, %v508
    %s511 = scalar_lea.vmem %s0, 12
    %v512 = vld [vmem:[%s511] sm:$0x3]
    %v513 = vpack.c.bf16 %v510, %v510
    %515 = vrot.lane.b32.xlu0 %v513, 64
    %v516 = vpop.permute.xlu0 %515
    %v518 = vsel %vm72, %v516, 0
    %520 = vmatprep.subr.bf16.mxu0 0
    %521 = vmatpush1.bf16.msra.mxu0 %v68
    %522 = vmatprep.subr.bf16.mxu0 0
    %523 = vmatpush1.bf16.msra.mxu0 %v69
    %524 = vmatprep.subr.bf16.mxu0 0
    %525 = vmatpush1.bf16.msra.mxu0 0
    %526 = vmatprep.subr.bf16.mxu0 0
    %527 = vmatpush1.bf16.msra.mxu0 0
    %528 = vmatprep.subr.bf16.mxu0 0
    %529 = vmatpush1.bf16.msra.mxu0 0
    %530 = vmatprep.subr.bf16.mxu0 0
    %531 = vmatpush1.bf16.msra.mxu0 0
    %532 = vmatprep.subr.bf16.mxu0 0
    %533 = vmatpush1.bf16.msra.mxu0 0
    %534 = vmatprep.subr.bf16.mxu0 0
    %535 = vmatpush1.bf16.msra.mxu0 0
    %536 = vmatprep.subr.bf16.mxu0 0
    %537 = vmatpush1.bf16.msra.mxu0 0
    %538 = vmatprep.subr.bf16.mxu0 0
    %539 = vmatpush1.bf16.msra.mxu0 0
    %540 = vmatprep.subr.bf16.mxu0 0
    %541 = vmatpush1.bf16.msra.mxu0 0
    %542 = vmatprep.subr.bf16.mxu0 0
    %543 = vmatpush1.bf16.msra.mxu0 0
    %544 = vmatprep.subr.bf16.mxu0 0
    %545 = vmatpush1.bf16.msra.mxu0 0
    %546 = vmatprep.subr.bf16.mxu0 0
    %547 = vmatpush1.bf16.msra.mxu0 0
    %548 = vmatprep.subr.bf16.mxu0 0
    %549 = vmatpush1.bf16.msra.mxu0 0
    %550 = vmatprep.subr.bf16.mxu0 0
    %551 = vmatpush1.bf16.msra.mxu0 0
    %552 = vmatprep.mubr.bf16.mxu0 0
    %553 = vmatmul.mubr.bf16.gmra.mrb[0].mxu0 %v518
    %v554 = vpop.f32.mrb[0].mxu0
    %v555 = vadd.f32 0.0, %v554
    %v556 = vpop.f32.mrb[0].mxu0
    %v557 = vpop.f32.mrb[0].mxu0
    %v558 = vpop.f32.mrb[0].mxu0
    %559 = vdwg.mxu0
    %v560 = vadd.f32 %v512, %v555
    %v561 = vxor.u32 %v560, 2147483648
    %v562 = vmul.f32 %v561, 1.442695
    %v563 = vpow.pop %v562
    %v564 = vadd.f32 %v563, 1.0
    %v565 = vrcp.pop %v564
    %v566 = vmul.f32 1.0, %v565
    %v567 = vtanh.pop %v560
    %v568 = vmul.f32 %v566, %v504
    %570 = vrot.lane.b32.xlu0 %v567, 32
    %v571 = vpop.permute.xlu0 %570
    %v573 = vmul.f32 %v566, %v571
    %575 = vrot.lane.b32.xlu0 %v573, 32
    %v576 = vpop.permute.xlu0 %575
    %v578 = vadd.f32 %v568, %v576
    %v579 = vtanh.pop %v578
    %581 = vrot.lane.b32.xlu0 %v579, 32
    %v582 = vpop.permute.xlu0 %581
    %v584 = vmul.f32 %v566, %v582
    %s585 = scalar_lea.vmem %s0, 14
    %v586 = vld [vmem:[%s585] sm:$0x3]
    %v587 = vpack.c.bf16 %v584, %v584
    %589 = vrot.lane.b32.xlu0 %v587, 64
    %v590 = vpop.permute.xlu0 %589
    %v592 = vsel %vm72, %v590, 0
    %594 = vmatprep.subr.bf16.mxu0 0
    %595 = vmatpush1.bf16.msra.mxu0 %v68
    %596 = vmatprep.subr.bf16.mxu0 0
    %597 = vmatpush1.bf16.msra.mxu0 %v69
    %598 = vmatprep.subr.bf16.mxu0 0
    %599 = vmatpush1.bf16.msra.mxu0 0
    %600 = vmatprep.subr.bf16.mxu0 0
    %601 = vmatpush1.bf16.msra.mxu0 0
    %602 = vmatprep.subr.bf16.mxu0 0
    %603 = vmatpush1.bf16.msra.mxu0 0
    %604 = vmatprep.subr.bf16.mxu0 0
    %605 = vmatpush1.bf16.msra.mxu0 0
    %606 = vmatprep.subr.bf16.mxu0 0
    %607 = vmatpush1.bf16.msra.mxu0 0
    %608 = vmatprep.subr.bf16.mxu0 0
    %609 = vmatpush1.bf16.msra.mxu0 0
    %610 = vmatprep.subr.bf16.mxu0 0
    %611 = vmatpush1.bf16.msra.mxu0 0
    %612 = vmatprep.subr.bf16.mxu0 0
    %613 = vmatpush1.bf16.msra.mxu0 0
    %614 = vmatprep.subr.bf16.mxu0 0
    %615 = vmatpush1.bf16.msra.mxu0 0
    %616 = vmatprep.subr.bf16.mxu0 0
    %617 = vmatpush1.bf16.msra.mxu0 0
    %618 = vmatprep.subr.bf16.mxu0 0
    %619 = vmatpush1.bf16.msra.mxu0 0
    %620 = vmatprep.subr.bf16.mxu0 0
    %621 = vmatpush1.bf16.msra.mxu0 0
    %622 = vmatprep.subr.bf16.mxu0 0
    %623 = vmatpush1.bf16.msra.mxu0 0
    %624 = vmatprep.subr.bf16.mxu0 0
    %625 = vmatpush1.bf16.msra.mxu0 0
    %626 = vmatprep.mubr.bf16.mxu0 0
    %627 = vmatmul.mubr.bf16.gmra.mrb[0].mxu0 %v592
    %v628 = vpop.f32.mrb[0].mxu0
    %v629 = vadd.f32 0.0, %v628
    %v630 = vpop.f32.mrb[0].mxu0
    %v631 = vpop.f32.mrb[0].mxu0
    %v632 = vpop.f32.mrb[0].mxu0
    %633 = vdwg.mxu0
    %v634 = vadd.f32 %v586, %v629
    %v635 = vxor.u32 %v634, 2147483648
    %v636 = vmul.f32 %v635, 1.442695
    %v637 = vpow.pop %v636
    %v638 = vadd.f32 %v637, 1.0
    %v639 = vrcp.pop %v638
    %v640 = vmul.f32 1.0, %v639
    %v641 = vtanh.pop %v634
    %v642 = vmul.f32 %v640, %v578
    %644 = vrot.lane.b32.xlu0 %v641, 32
    %v645 = vpop.permute.xlu0 %644
    %v647 = vmul.f32 %v640, %v645
    %649 = vrot.lane.b32.xlu0 %v647, 32
    %v650 = vpop.permute.xlu0 %649
    %v652 = vadd.f32 %v642, %v650
    %v653 = vtanh.pop %v652
    %655 = vrot.lane.b32.xlu0 %v653, 32
    %v656 = vpop.permute.xlu0 %655
    %v658 = vmul.f32 %v640, %v656
    %v659 = vld [vmem:[%s2] sm:$0x1]
    %s660 = sld [smem:[#allocation2]]
    %v661 = vld [vmem:[%s3] sm:$0xf]
    %v662 = vld [vmem:[%s3 + $0x4] sm:$0xf]
    %v663 = vld [vmem:[%s3 + $0x8] sm:$0xf]
    %v664 = vld [vmem:[%s3 + $0xc] sm:$0xf]
    %v665 = vld [vmem:[%s3 + $0x10] sm:$0xf]
    %v666 = vld [vmem:[%s3 + $0x14] sm:$0xf]
    %v667 = vld [vmem:[%s3 + $0x18] sm:$0xf]
    %v668 = vld [vmem:[%s3 + $0x1c] sm:$0xf]
    %v669 = vld [vmem:[%s4] sm:$0x1]
    %v670 = vld [vmem:[%s5] sm:$0x1]
    %v671 = vld [vmem:[%s6] sm:$0x1]
    %s672 = sld [smem:[#allocation3]]
    %v673 = vld [vmem:[%s7] sm:$0x3]
    %v675 = vlaneseq
    %v676 = vshrl.u32 %v675, 7
    %v677 = vsub.s32 0, %v676
    %v678 = vrot.slane %v659, %v677
    %679 = vrot.lane.b32.xlu0 %v678, 32
    %v680 = vpop.permute.xlu0 %679
    %v682 = vmul.f32 %v140, %v680
    %v683 = vmul.f32 %v214, %v680
    %v684 = vmul.f32 %v288, %v680
    %v685 = vmul.f32 %v362, %v680
    %v686 = vmul.f32 %v436, %v680
    %v687 = vmul.f32 %v510, %v680
    %v688 = vmul.f32 %v584, %v680
    %v689 = vmul.f32 %v658, %v680
    %698 = vrot.lane.b32.xlu0 %v682, 64
    %v699 = vpop.permute.xlu0 %698
    %700 = vrot.lane.b32.xlu0 %v683, 64
    %v701 = vpop.permute.xlu0 %700
    %702 = vrot.lane.b32.xlu0 %v684, 64
    %v703 = vpop.permute.xlu0 %702
    %704 = vrot.lane.b32.xlu0 %v685, 64
    %v705 = vpop.permute.xlu0 %704
    %706 = vrot.lane.b32.xlu0 %v686, 64
    %v707 = vpop.permute.xlu0 %706
    %708 = vrot.lane.b32.xlu0 %v687, 64
    %v709 = vpop.permute.xlu0 %708
    %710 = vrot.lane.b32.xlu0 %v688, 64
    %v711 = vpop.permute.xlu0 %710
    %712 = vrot.lane.b32.xlu0 %v689, 64
    %v713 = vpop.permute.xlu0 %712
    %vm722 = vcmask 254976
    %v723 = vsel %vm722, %v699, 0.0
    %724 = vadd.xlane.f32.xlu0 %v723
    %v725 = vpop.xlane.xlu0 %724
    %v726 = vsel %vm722, %v701, 0.0
    %727 = vadd.xlane.f32.xlu0 %v726
    %v728 = vpop.xlane.xlu0 %727
    %v729 = vsel %vm722, %v703, 0.0
    %730 = vadd.xlane.f32.xlu0 %v729
    %v731 = vpop.xlane.xlu0 %730
    %v732 = vsel %vm722, %v705, 0.0
    %733 = vadd.xlane.f32.xlu0 %v732
    %v734 = vpop.xlane.xlu0 %733
    %v735 = vsel %vm722, %v707, 0.0
    %736 = vadd.xlane.f32.xlu0 %v735
    %v737 = vpop.xlane.xlu0 %736
    %v738 = vsel %vm722, %v709, 0.0
    %739 = vadd.xlane.f32.xlu0 %v738
    %v740 = vpop.xlane.xlu0 %739
    %v741 = vsel %vm722, %v711, 0.0
    %742 = vadd.xlane.f32.xlu0 %v741
    %v743 = vpop.xlane.xlu0 %742
    %v744 = vsel %vm722, %v713, 0.0
    %745 = vadd.xlane.f32.xlu0 %v744
    %v746 = vpop.xlane.xlu0 %745
    %v747 = vstv %s660
    %v748 = vadd.f32 %v725, %v747
    %v749 = vadd.f32 %v728, %v747
    %v750 = vadd.f32 %v731, %v747
    %v751 = vadd.f32 %v734, %v747
    %v752 = vadd.f32 %v737, %v747
    %v753 = vadd.f32 %v740, %v747
    %v754 = vadd.f32 %v743, %v747
    %v755 = vadd.f32 %v746, %v747
    %756 = vrot.lane.b32.xlu0 %v678, 64
    %v757 = vpop.permute.xlu0 %756
    %v759 = vmul.f32 %v658, %v757
    %761 = vrot.lane.b32.xlu0 %v759, 64
    %v762 = vpop.permute.xlu0 %761
    %v764 = vsel %vm722, %v762, 0.0
    %765 = vadd.xlane.f32.xlu0 %v764
    %v766 = vpop.xlane.xlu0 %765
    %v767 = vadd.f32 %v748, %v766
    %v768 = vadd.f32 %v749, %v766
    %v769 = vadd.f32 %v750, %v766
    %v770 = vadd.f32 %v751, %v766
    %v771 = vadd.f32 %v752, %v766
    %v772 = vadd.f32 %v753, %v766
    %v773 = vadd.f32 %v754, %v766
    %v774 = vadd.f32 %v755, %v766
    %v775 = vmax.f32 %v767, 0.0
    %v776 = vmax.f32 %v768, 0.0
    %v777 = vmax.f32 %v769, 0.0
    %v778 = vmax.f32 %v770, 0.0
    %v779 = vmax.f32 %v771, 0.0
    %v780 = vmax.f32 %v772, 0.0
    %v781 = vmax.f32 %v773, 0.0
    %v782 = vmax.f32 %v774, 0.0
    %vm783 = vcmask 1041408
    %v784 = vsel %vm783, %v775, -inf
    %v785 = vsel %vm783, %v776, -inf
    %v786 = vsel %vm783, %v777, -inf
    %v787 = vsel %vm783, %v778, -inf
    %v788 = vsel %vm783, %v779, -inf
    %v789 = vmax.f32 %v784, %v788
    %v790 = vsel %vm783, %v780, -inf
    %v791 = vmax.f32 %v785, %v790
    %v792 = vsel %vm783, %v781, -inf
    %v793 = vmax.f32 %v786, %v792
    %v794 = vsel %vm783, %v782, -inf
    %v795 = vmax.f32 %v787, %v794
    %v796 = vmax.f32 %v789, %v791
    %v797 = vmax.f32 %v793, %v795
    %v798 = vmax.f32 %v796, %v797
    %v799 = vsub.f32 %v775, %v798
    %v800 = vsub.f32 %v776, %v798
    %v801 = vsub.f32 %v777, %v798
    %v802 = vsub.f32 %v778, %v798
    %v803 = vsub.f32 %v779, %v798
    %v804 = vsub.f32 %v780, %v798
    %v805 = vsub.f32 %v781, %v798
    %v806 = vsub.f32 %v782, %v798
    %v807 = vmul.f32 %v799, 1.442695
    %v808 = vpow.pop %v807
    %v809 = vmul.f32 %v800, 1.442695
    %v810 = vpow.pop %v809
    %v811 = vmul.f32 %v801, 1.442695
    %v812 = vpow.pop %v811
    %v813 = vmul.f32 %v802, 1.442695
    %v814 = vpow.pop %v813
    %v815 = vmul.f32 %v803, 1.442695
    %v816 = vpow.pop %v815
    %v817 = vmul.f32 %v804, 1.442695
    %v818 = vpow.pop %v817
    %v819 = vmul.f32 %v805, 1.442695
    %v820 = vpow.pop %v819
    %v821 = vmul.f32 %v806, 1.442695
    %v822 = vpow.pop %v821
    %v823 = vsel %vm783, %v808, 0.0
    %v824 = vsel %vm783, %v810, 0.0
    %v825 = vadd.f32 %v823, %v824
    %v826 = vsel %vm783, %v812, 0.0
    %v827 = vadd.f32 %v825, %v826
    %v828 = vsel %vm783, %v814, 0.0
    %v829 = vadd.f32 %v827, %v828
    %v830 = vsel %vm783, %v816, 0.0
    %v831 = vadd.f32 %v829, %v830
    %v832 = vsel %vm783, %v818, 0.0
    %v833 = vadd.f32 %v831, %v832
    %v834 = vsel %vm783, %v820, 0.0
    %v835 = vadd.f32 %v833, %v834
    %v836 = vsel %vm783, %v822, 0.0
    %v837 = vadd.f32 %v835, %v836
    %v838 = vrcp.pop %v837
    %v839 = vmul.f32 %v808, %v838
    %v840 = vmul.f32 %v810, %v838
    %v841 = vmul.f32 %v812, %v838
    %v842 = vmul.f32 %v814, %v838
    %v843 = vmul.f32 %v816, %v838
    %v844 = vmul.f32 %v818, %v838
    %v845 = vmul.f32 %v820, %v838
    %v846 = vmul.f32 %v822, %v838
    %v847 = vmul.f32 %v839, %v140
    %v848 = vmul.f32 %v840, %v214
    %v849 = vmul.f32 %v841, %v288
    %v850 = vmul.f32 %v842, %v362
    %v851 = vmul.f32 %v843, %v436
    %v852 = vmul.f32 %v844, %v510
    %v853 = vmul.f32 %v845, %v584
    %v854 = vmul.f32 %v846, %v658
    %vm855 = vcmask 779776
    %v856 = vsel %vm855, %v847, 0.0
    %v857 = vsel %vm855, %v848, 0.0
    %v858 = vadd.f32 %v856, %v857
    %v859 = vsel %vm855, %v849, 0.0
    %v860 = vadd.f32 %v858, %v859
    %v861 = vsel %vm855, %v850, 0.0
    %v862 = vadd.f32 %v860, %v861
    %v863 = vsel %vm855, %v851, 0.0
    %v864 = vadd.f32 %v862, %v863
    %v865 = vsel %vm855, %v852, 0.0
    %v866 = vadd.f32 %v864, %v865
    %v867 = vsel %vm855, %v853, 0.0
    %v868 = vadd.f32 %v866, %v867
    %v869 = vsel %vm855, %v854, 0.0
    %v870 = vadd.f32 %v868, %v869
    %872 = vrot.lane.b32.xlu0 %v870, 64
    %v873 = vpop.permute.xlu0 %872
    %876 = vrot.lane.b32.xlu0 %v658, 96
    %v877 = vpop.permute.xlu0 %876
    %v879 = vsel %vm72, %v873, %v877
    %v880 = vpack.c.bf16 %v879, %v879
    %882 = vset.pattern.permute.xlu0 0
    %883 = vperm.xlu0 %882, %v673
    %v884 = vpop.permute.xlu0 %883
    %v887 = vlaneseq
    %v888 = vshrl.u32 %v887, 7
    %v889 = vsub.s32 0, %v888
    %v890 = vrot.slane %v669, %v889
    %v892 = vmul.f32 %v884, %v890
    %v901 = vunpack.c.l.b16 %v661
    %v902 = vunpack.c.l.b16 %v662
    %v903 = vunpack.c.l.b16 %v663
    %v904 = vunpack.c.l.b16 %v664
    %v905 = vunpack.c.l.b16 %v665
    %v906 = vunpack.c.l.b16 %v666
    %v907 = vunpack.c.l.b16 %v667
    %v908 = vunpack.c.l.b16 %v668
    %v909 = vpack.c.b16 %v902, %v901
    %v910 = vpack.c.b16 %v904, %v903
    %v911 = vpack.c.b16 %v906, %v905
    %v912 = vpack.c.b16 %v908, %v907
    %vm917 = vcmask 523264
    %v919 = vsel %vm917, %v880, 0
    %921 = vmatprep.subr.bf16.mxu0 0
    %922 = vmatpush1.bf16.msra.mxu0 %v909
    %923 = vmatprep.subr.bf16.mxu0 0
    %924 = vmatpush1.bf16.msra.mxu0 %v910
    %925 = vmatprep.subr.bf16.mxu0 0
    %926 = vmatpush1.bf16.msra.mxu0 %v911
    %927 = vmatprep.subr.bf16.mxu0 0
    %928 = vmatpush1.bf16.msra.mxu0 %v912
    %929 = vmatprep.subr.bf16.mxu0 0
    %930 = vmatpush1.bf16.msra.mxu0 0
    %931 = vmatprep.subr.bf16.mxu0 0
    %932 = vmatpush1.bf16.msra.mxu0 0
    %933 = vmatprep.subr.bf16.mxu0 0
    %934 = vmatpush1.bf16.msra.mxu0 0
    %935 = vmatprep.subr.bf16.mxu0 0
    %936 = vmatpush1.bf16.msra.mxu0 0
    %937 = vmatprep.subr.bf16.mxu0 0
    %938 = vmatpush1.bf16.msra.mxu0 0
    %939 = vmatprep.subr.bf16.mxu0 0
    %940 = vmatpush1.bf16.msra.mxu0 0
    %941 = vmatprep.subr.bf16.mxu0 0
    %942 = vmatpush1.bf16.msra.mxu0 0
    %943 = vmatprep.subr.bf16.mxu0 0
    %944 = vmatpush1.bf16.msra.mxu0 0
    %945 = vmatprep.subr.bf16.mxu0 0
    %946 = vmatpush1.bf16.msra.mxu0 0
    %947 = vmatprep.subr.bf16.mxu0 0
    %948 = vmatpush1.bf16.msra.mxu0 0
    %949 = vmatprep.subr.bf16.mxu0 0
    %950 = vmatpush1.bf16.msra.mxu0 0
    %951 = vmatprep.subr.bf16.mxu0 0
    %952 = vmatpush1.bf16.msra.mxu0 0
    %953 = vmatprep.mubr.bf16.mxu0 0
    %954 = vmatmul.mubr.bf16.gmra.mrb[0].mxu0 %v919
    %v955 = vpop.f32.mrb[0].mxu0
    %v956 = vadd.f32 %v892, %v955
    %v957 = vpop.f32.mrb[0].mxu0
    %v958 = vpop.f32.mrb[0].mxu0
    %v959 = vpop.f32.mrb[0].mxu0
    %960 = vdwg.mxu0
    %v962 = vlaneseq
    %v963 = vshrl.u32 %v962, 7
    %v964 = vsub.s32 0, %v963
    %v965 = vrot.slane %v670, %v964
    %v967 = vadd.f32 %v956, %v965
    %v968 = vxor.u32 %v967, 2147483648
    %v969 = vmul.f32 %v968, 1.442695
    %v970 = vpow.pop %v969
    %v971 = vadd.f32 %v970, 1.0
    %v972 = vrcp.pop %v971
    %v973 = vmul.f32 1.0, %v972
    %v974 = vtanh.pop %v967
    %v975 = vmul.f32 %v973, %v652
    %977 = vrot.lane.b32.xlu0 %v974, 32
    %v978 = vpop.permute.xlu0 %977
    %v980 = vmul.f32 %v973, %v978
    %982 = vrot.lane.b32.xlu0 %v980, 32
    %v983 = vpop.permute.xlu0 %982
    %v985 = vadd.f32 %v975, %v983
    %v986 = vtanh.pop %v985
    %988 = vrot.lane.b32.xlu0 %v986, 32
    %v989 = vpop.permute.xlu0 %988
    %v991 = vmul.f32 %v973, %v989
    %v993 = vlaneseq
    %v994 = vshrl.u32 %v993, 7
    %v995 = vsub.s32 0, %v994
    %v996 = vrot.slane %v671, %v995
    %997 = vrot.lane.b32.xlu0 %v996, 64
    %v998 = vpop.permute.xlu0 %997
    %v1000 = vmul.f32 %v991, %v998
    %1002 = vrot.lane.b32.xlu0 %v1000, 64
    %v1003 = vpop.permute.xlu0 %1002
    %v1005 = vsel %vm722, %v1003, 0.0
    %1006 = vadd.xlane.f32.xlu0 %v1005
    %v1007 = vpop.xlane.xlu0 %1006
    %v1008 = vstv %s672
    %v1009 = vadd.f32 %v1007, %v1008
    %s1010 = sld [smem:[#allocation4]]
    %p1011 = scmp.gt.s32.totalorder %s1010, 0
    %s1012 = scalar_select %p1011, 1, 0
    %v1013 = vstv %s1012
    %vm1014 = vcmp.eq.s32.totalorder %v1013, 1
    %v1015 = vsel %vm1014, %v673, %v1009
    %v1016 = vmul.f32 %v991, %v757
    %1018 = vrot.lane.b32.xlu0 %v1016, 64
    %v1019 = vpop.permute.xlu0 %1018
    %v1021 = vsel %vm722, %v1019, 0.0
    %1022 = vadd.xlane.f32.xlu0 %v1021
    %v1023 = vpop.xlane.xlu0 %1022
    %v1024 = vadd.f32 %v748, %v1023
    %v1025 = vadd.f32 %v749, %v1023
    %v1026 = vadd.f32 %v750, %v1023
    %v1027 = vadd.f32 %v751, %v1023
    %v1028 = vadd.f32 %v752, %v1023
    %v1029 = vadd.f32 %v753, %v1023
    %v1030 = vadd.f32 %v754, %v1023
    %v1031 = vadd.f32 %v755, %v1023
    %v1032 = vmax.f32 %v1024, 0.0
    %v1033 = vmax.f32 %v1025, 0.0
    %v1034 = vmax.f32 %v1026, 0.0
    %v1035 = vmax.f32 %v1027, 0.0
    %v1036 = vmax.f32 %v1028, 0.0
    %v1037 = vmax.f32 %v1029, 0.0
    %v1038 = vmax.f32 %v1030, 0.0
    %v1039 = vmax.f32 %v1031, 0.0
    %v1040 = vsel %vm783, %v1032, -inf
    %v1041 = vsel %vm783, %v1033, -inf
    %v1042 = vsel %vm783, %v1034, -inf
    %v1043 = vsel %vm783, %v1035, -inf
    %v1044 = vsel %vm783, %v1036, -inf
    %v1045 = vmax.f32 %v1040, %v1044
    %v1046 = vsel %vm783, %v1037, -inf
    %v1047 = vmax.f32 %v1041, %v1046
    %v1048 = vsel %vm783, %v1038, -inf
    %v1049 = vmax.f32 %v1042, %v1048
    %v1050 = vsel %vm783, %v1039, -inf
    %v1051 = vmax.f32 %v1043, %v1050
    %v1052 = vmax.f32 %v1045, %v1047
    %v1053 = vmax.f32 %v1049, %v1051
    %v1054 = vmax.f32 %v1052, %v1053
    %v1055 = vsub.f32 %v1032, %v1054
    %v1056 = vsub.f32 %v1033, %v1054
    %v1057 = vsub.f32 %v1034, %v1054
    %v1058 = vsub.f32 %v1035, %v1054
    %v1059 = vsub.f32 %v1036, %v1054
    %v1060 = vsub.f32 %v1037, %v1054
    %v1061 = vsub.f32 %v1038, %v1054
    %v1062 = vsub.f32 %v1039, %v1054
    %v1063 = vmul.f32 %v1055, 1.442695
    %v1064 = vpow.pop %v1063
    %v1065 = vmul.f32 %v1056, 1.442695
    %v1066 = vpow.pop %v1065
    %v1067 = vmul.f32 %v1057, 1.442695
    %v1068 = vpow.pop %v1067
    %v1069 = vmul.f32 %v1058, 1.442695
    %v1070 = vpow.pop %v1069
    %v1071 = vmul.f32 %v1059, 1.442695
    %v1072 = vpow.pop %v1071
    %v1073 = vmul.f32 %v1060, 1.442695
    %v1074 = vpow.pop %v1073
    %v1075 = vmul.f32 %v1061, 1.442695
    %v1076 = vpow.pop %v1075
    %v1077 = vmul.f32 %v1062, 1.442695
    %v1078 = vpow.pop %v1077
    %v1079 = vsel %vm783, %v1064, 0.0
    %v1080 = vsel %vm783, %v1066, 0.0
    %v1081 = vadd.f32 %v1079, %v1080
    %v1082 = vsel %vm783, %v1068, 0.0
    %v1083 = vadd.f32 %v1081, %v1082
    %v1084 = vsel %vm783, %v1070, 0.0
    %v1085 = vadd.f32 %v1083, %v1084
    %v1086 = vsel %vm783, %v1072, 0.0
    %v1087 = vadd.f32 %v1085, %v1086
    %v1088 = vsel %vm783, %v1074, 0.0
    %v1089 = vadd.f32 %v1087, %v1088
    %v1090 = vsel %vm783, %v1076, 0.0
    %v1091 = vadd.f32 %v1089, %v1090
    %v1092 = vsel %vm783, %v1078, 0.0
    %v1093 = vadd.f32 %v1091, %v1092
    %v1094 = vrcp.pop %v1093
    %v1095 = vmul.f32 %v1064, %v1094
    %v1096 = vmul.f32 %v1066, %v1094
    %v1097 = vmul.f32 %v1068, %v1094
    %v1098 = vmul.f32 %v1070, %v1094
    %v1099 = vmul.f32 %v1072, %v1094
    %v1100 = vmul.f32 %v1074, %v1094
    %v1101 = vmul.f32 %v1076, %v1094
    %v1102 = vmul.f32 %v1078, %v1094
    %v1103 = vmul.f32 %v1095, %v140
    %v1104 = vmul.f32 %v1096, %v214
    %v1105 = vmul.f32 %v1097, %v288
    %v1106 = vmul.f32 %v1098, %v362
    %v1107 = vmul.f32 %v1099, %v436
    %v1108 = vmul.f32 %v1100, %v510
    %v1109 = vmul.f32 %v1101, %v584
    %v1110 = vmul.f32 %v1102, %v658
    %v1111 = vsel %vm855, %v1103, 0.0
    %v1112 = vsel %vm855, %v1104, 0.0
    %v1113 = vadd.f32 %v1111, %v1112
    %v1114 = vsel %vm855, %v1105, 0.0
    %v1115 = vadd.f32 %v1113, %v1114
    %v1116 = vsel %vm855, %v1106, 0.0
    %v1117 = vadd.f32 %v1115, %v1116
    %v1118 = vsel %vm855, %v1107, 0.0
    %v1119 = vadd.f32 %v1117, %v1118
    %v1120 = vsel %vm855, %v1108, 0.0
    %v1121 = vadd.f32 %v1119, %v1120
    %v1122 = vsel %vm855, %v1109, 0.0
    %v1123 = vadd.f32 %v1121, %v1122
    %v1124 = vsel %vm855, %v1110, 0.0
    %v1125 = vadd.f32 %v1123, %v1124
    %1127 = vrot.lane.b32.xlu0 %v1125, 64
    %v1128 = vpop.permute.xlu0 %1127
    %1131 = vrot.lane.b32.xlu0 %v991, 96
    %v1132 = vpop.permute.xlu0 %1131
    %v1134 = vsel %vm72, %v1128, %v1132
    %v1135 = vpack.c.bf16 %v1134, %v1134
    %1137 = vset.pattern.permute.xlu0 0
    %1138 = vperm.xlu0 %1137, %v1015
    %v1139 = vpop.permute.xlu0 %1138
    %v1141 = vmul.f32 %v1139, %v890
    %v1143 = vsel %vm917, %v1135, 0
    %1145 = vmatprep.subr.bf16.mxu0 0
    %1146 = vmatpush1.bf16.msra.mxu0 %v909
    %1147 = vmatprep.subr.bf16.mxu0 0
    %1148 = vmatpush1.bf16.msra.mxu0 %v910
    %1149 = vmatprep.subr.bf16.mxu0 0
    %1150 = vmatpush1.bf16.msra.mxu0 %v911
    %1151 = vmatprep.subr.bf16.mxu0 0
    %1152 = vmatpush1.bf16.msra.mxu0 %v912
    %1153 = vmatprep.subr.bf16.mxu0 0
    %1154 = vmatpush1.bf16.msra.mxu0 0
    %1155 = vmatprep.subr.bf16.mxu0 0
    %1156 = vmatpush1.bf16.msra.mxu0 0
    %1157 = vmatprep.subr.bf16.mxu0 0
    %1158 = vmatpush1.bf16.msra.mxu0 0
    %1159 = vmatprep.subr.bf16.mxu0 0
    %1160 = vmatpush1.bf16.msra.mxu0 0
    %1161 = vmatprep.subr.bf16.mxu0 0
    %1162 = vmatpush1.bf16.msra.mxu0 0
    %1163 = vmatprep.subr.bf16.mxu0 0
    %1164 = vmatpush1.bf16.msra.mxu0 0
    %1165 = vmatprep.subr.bf16.mxu0 0
    %1166 = vmatpush1.bf16.msra.mxu0 0
    %1167 = vmatprep.subr.bf16.mxu0 0
    %1168 = vmatpush1.bf16.msra.mxu0 0
    %1169 = vmatprep.subr.bf16.mxu0 0
    %1170 = vmatpush1.bf16.msra.mxu0 0
    %1171 = vmatprep.subr.bf16.mxu0 0
    %1172 = vmatpush1.bf16.msra.mxu0 0
    %1173 = vmatprep.subr.bf16.mxu0 0
    %1174 = vmatpush1.bf16.msra.mxu0 0
    %1175 = vmatprep.subr.bf16.mxu0 0
    %1176 = vmatpush1.bf16.msra.mxu0 0
    %1177 = vmatprep.mubr.bf16.mxu0 0
    %1178 = vmatmul.mubr.bf16.gmra.mrb[0].mxu0 %v1143
    %v1179 = vpop.f32.mrb[0].mxu0
    %v1180 = vadd.f32 %v1141, %v1179
    %v1181 = vpop.f32.mrb[0].mxu0
    %v1182 = vpop.f32.mrb[0].mxu0
    %v1183 = vpop.f32.mrb[0].mxu0
    %1184 = vdwg.mxu0
    %v1185 = vadd.f32 %v1180, %v965
    %v1186 = vxor.u32 %v1185, 2147483648
    %v1187 = vmul.f32 %v1186, 1.442695
    %v1188 = vpow.pop %v1187
    %v1189 = vadd.f32 %v1188, 1.0
    %v1190 = vrcp.pop %v1189
    %v1191 = vmul.f32 1.0, %v1190
    %v1192 = vtanh.pop %v1185
    %v1193 = vmul.f32 %v1191, %v985
    %1195 = vrot.lane.b32.xlu0 %v1192, 32
    %v1196 = vpop.permute.xlu0 %1195
    %v1198 = vmul.f32 %v1191, %v1196
    %1200 = vrot.lane.b32.xlu0 %v1198, 32
    %v1201 = vpop.permute.xlu0 %1200
    %v1203 = vadd.f32 %v1193, %v1201
    %v1204 = vtanh.pop %v1203
    %1206 = vrot.lane.b32.xlu0 %v1204, 32
    %v1207 = vpop.permute.xlu0 %1206
    %v1209 = vmul.f32 %v1191, %v1207
    %v1210 = vmul.f32 %v1209, %v998
    %1212 = vrot.lane.b32.xlu0 %v1210, 64
    %v1213 = vpop.permute.xlu0 %1212
    %v1215 = vsel %vm722, %v1213, 0.0
    %1216 = vadd.xlane.f32.xlu0 %v1215
    %v1217 = vpop.xlane.xlu0 %1216
    %v1218 = vadd.f32 %v1217, %v1008
    %s1219 = sld [smem:[#allocation4 + $0x1]]
    %p1220 = scmp.gt.s32.totalorder %s1219, 0
    %s1221 = scalar_select %p1220, 1, 0
    %v1222 = vstv %s1221
    %vm1223 = vcmp.eq.s32.totalorder %v1222, 1
    %v1224 = vsel %vm1223, %v673, %v1218
    %v1225 = vmul.f32 %v1209, %v757
    %1227 = vrot.lane.b32.xlu0 %v1225, 64
    %v1228 = vpop.permute.xlu0 %1227
    %v1230 = vsel %vm722, %v1228, 0.0
    %1231 = vadd.xlane.f32.xlu0 %v1230
    %v1232 = vpop.xlane.xlu0 %1231
    %v1233 = vadd.f32 %v748, %v1232
    %v1234 = vadd.f32 %v749, %v1232
    %v1235 = vadd.f32 %v750, %v1232
    %v1236 = vadd.f32 %v751, %v1232
    %v1237 = vadd.f32 %v752, %v1232
    %v1238 = vadd.f32 %v753, %v1232
    %v1239 = vadd.f32 %v754, %v1232
    %v1240 = vadd.f32 %v755, %v1232
    %v1241 = vmax.f32 %v1233, 0.0
    %v1242 = vmax.f32 %v1234, 0.0
    %v1243 = vmax.f32 %v1235, 0.0
    %v1244 = vmax.f32 %v1236, 0.0
    %v1245 = vmax.f32 %v1237, 0.0
    %v1246 = vmax.f32 %v1238, 0.0
    %v1247 = vmax.f32 %v1239, 0.0
    %v1248 = vmax.f32 %v1240, 0.0
    %v1249 = vsel %vm783, %v1241, -inf
    %v1250 = vsel %vm783, %v1242, -inf
    %v1251 = vsel %vm783, %v1243, -inf
    %v1252 = vsel %vm783, %v1244, -inf
    %v1253 = vsel %vm783, %v1245, -inf
    %v1254 = vmax.f32 %v1249, %v1253
    %v1255 = vsel %vm783, %v1246, -inf
    %v1256 = vmax.f32 %v1250, %v1255
    %v1257 = vsel %vm783, %v1247, -inf
    %v1258 = vmax.f32 %v1251, %v1257
    %v1259 = vsel %vm783, %v1248, -inf
    %v1260 = vmax.f32 %v1252, %v1259
    %v1261 = vmax.f32 %v1254, %v1256
    %v1262 = vmax.f32 %v1258, %v1260
    %v1263 = vmax.f32 %v1261, %v1262
    %v1264 = vsub.f32 %v1241, %v1263
    %v1265 = vsub.f32 %v1242, %v1263
    %v1266 = vsub.f32 %v1243, %v1263
    %v1267 = vsub.f32 %v1244, %v1263
    %v1268 = vsub.f32 %v1245, %v1263
    %v1269 = vsub.f32 %v1246, %v1263
    %v1270 = vsub.f32 %v1247, %v1263
    %v1271 = vsub.f32 %v1248, %v1263
    %v1272 = vmul.f32 %v1264, 1.442695
    %v1273 = vpow.pop %v1272
    %v1274 = vmul.f32 %v1265, 1.442695
    %v1275 = vpow.pop %v1274
    %v1276 = vmul.f32 %v1266, 1.442695
    %v1277 = vpow.pop %v1276
    %v1278 = vmul.f32 %v1267, 1.442695
    %v1279 = vpow.pop %v1278
    %v1280 = vmul.f32 %v1268, 1.442695
    %v1281 = vpow.pop %v1280
    %v1282 = vmul.f32 %v1269, 1.442695
    %v1283 = vpow.pop %v1282
    %v1284 = vmul.f32 %v1270, 1.442695
    %v1285 = vpow.pop %v1284
    %v1286 = vmul.f32 %v1271, 1.442695
    %v1287 = vpow.pop %v1286
    %v1288 = vsel %vm783, %v1273, 0.0
    %v1289 = vsel %vm783, %v1275, 0.0
    %v1290 = vadd.f32 %v1288, %v1289
    %v1291 = vsel %vm783, %v1277, 0.0
    %v1292 = vadd.f32 %v1290, %v1291
    %v1293 = vsel %vm783, %v1279, 0.0
    %v1294 = vadd.f32 %v1292, %v1293
    %v1295 = vsel %vm783, %v1281, 0.0
    %v1296 = vadd.f32 %v1294, %v1295
    %v1297 = vsel %vm783, %v1283, 0.0
    %v1298 = vadd.f32 %v1296, %v1297
    %v1299 = vsel %vm783, %v1285, 0.0
    %v1300 = vadd.f32 %v1298, %v1299
    %v1301 = vsel %vm783, %v1287, 0.0
    %v1302 = vadd.f32 %v1300, %v1301
    %v1303 = vrcp.pop %v1302
    %v1304 = vmul.f32 %v1273, %v1303
    %v1305 = vmul.f32 %v1275, %v1303
    %v1306 = vmul.f32 %v1277, %v1303
    %v1307 = vmul.f32 %v1279, %v1303
    %v1308 = vmul.f32 %v1281, %v1303
    %v1309 = vmul.f32 %v1283, %v1303
    %v1310 = vmul.f32 %v1285, %v1303
    %v1311 = vmul.f32 %v1287, %v1303
    %v1312 = vmul.f32 %v1304, %v140
    %v1313 = vmul.f32 %v1305, %v214
    %v1314 = vmul.f32 %v1306, %v288
    %v1315 = vmul.f32 %v1307, %v362
    %v1316 = vmul.f32 %v1308, %v436
    %v1317 = vmul.f32 %v1309, %v510
    %v1318 = vmul.f32 %v1310, %v584
    %v1319 = vmul.f32 %v1311, %v658
    %v1320 = vsel %vm855, %v1312, 0.0
    %v1321 = vsel %vm855, %v1313, 0.0
    %v1322 = vadd.f32 %v1320, %v1321
    %v1323 = vsel %vm855, %v1314, 0.0
    %v1324 = vadd.f32 %v1322, %v1323
    %v1325 = vsel %vm855, %v1315, 0.0
    %v1326 = vadd.f32 %v1324, %v1325
    %v1327 = vsel %vm855, %v1316, 0.0
    %v1328 = vadd.f32 %v1326, %v1327
    %v1329 = vsel %vm855, %v1317, 0.0
    %v1330 = vadd.f32 %v1328, %v1329
    %v1331 = vsel %vm855, %v1318, 0.0
    %v1332 = vadd.f32 %v1330, %v1331
    %v1333 = vsel %vm855, %v1319, 0.0
    %v1334 = vadd.f32 %v1332, %v1333
    %1336 = vrot.lane.b32.xlu0 %v1334, 64
    %v1337 = vpop.permute.xlu0 %1336
    %1340 = vrot.lane.b32.xlu0 %v1209, 96
    %v1341 = vpop.permute.xlu0 %1340
    %v1343 = vsel %vm72, %v1337, %v1341
    %v1344 = vpack.c.bf16 %v1343, %v1343
    %1346 = vset.pattern.permute.xlu0 1
    %1347 = vperm.xlu0 %1346, %v1224
    %v1348 = vpop.permute.xlu0 %1347
    %v1350 = vmul.f32 %v1348, %v890
    %v1352 = vsel %vm917, %v1344, 0
    %1354 = vmatprep.subr.bf16.mxu0 0
    %1355 = vmatpush1.bf16.msra.mxu0 %v909
    %1356 = vmatprep.subr.bf16.mxu0 0
    %1357 = vmatpush1.bf16.msra.mxu0 %v910
    %1358 = vmatprep.subr.bf16.mxu0 0
    %1359 = vmatpush1.bf16.msra.mxu0 %v911
    %1360 = vmatprep.subr.bf16.mxu0 0
    %1361 = vmatpush1.bf16.msra.mxu0 %v912
    %1362 = vmatprep.subr.bf16.mxu0 0
    %1363 = vmatpush1.bf16.msra.mxu0 0
    %1364 = vmatprep.subr.bf16.mxu0 0
    %1365 = vmatpush1.bf16.msra.mxu0 0
    %1366 = vmatprep.subr.bf16.mxu0 0
    %1367 = vmatpush1.bf16.msra.mxu0 0
    %1368 = vmatprep.subr.bf16.mxu0 0
    %1369 = vmatpush1.bf16.msra.mxu0 0
    %1370 = vmatprep.subr.bf16.mxu0 0
    %1371 = vmatpush1.bf16.msra.mxu0 0
    %1372 = vmatprep.subr.bf16.mxu0 0
    %1373 = vmatpush1.bf16.msra.mxu0 0
    %1374 = vmatprep.subr.bf16.mxu0 0
    %1375 = vmatpush1.bf16.msra.mxu0 0
    %1376 = vmatprep.subr.bf16.mxu0 0
    %1377 = vmatpush1.bf16.msra.mxu0 0
    %1378 = vmatprep.subr.bf16.mxu0 0
    %1379 = vmatpush1.bf16.msra.mxu0 0
    %1380 = vmatprep.subr.bf16.mxu0 0
    %1381 = vmatpush1.bf16.msra.mxu0 0
    %1382 = vmatprep.subr.bf16.mxu0 0
    %1383 = vmatpush1.bf16.msra.mxu0 0
    %1384 = vmatprep.subr.bf16.mxu0 0
    %1385 = vmatpush1.bf16.msra.mxu0 0
    %1386 = vmatprep.mubr.bf16.mxu0 0
    %1387 = vmatmul.mubr.bf16.gmra.mrb[0].mxu0 %v1352
    %v1388 = vpop.f32.mrb[0].mxu0
    %v1389 = vadd.f32 %v1350, %v1388
    %v1390 = vpop.f32.mrb[0].mxu0
    %v1391 = vpop.f32.mrb[0].mxu0
    %v1392 = vpop.f32.mrb[0].mxu0
    %1393 = vdwg.mxu0
    %v1394 = vadd.f32 %v1389, %v965
    %v1395 = vxor.u32 %v1394, 2147483648
    %v1396 = vmul.f32 %v1395, 1.442695
    %v1397 = vpow.pop %v1396
    %v1398 = vadd.f32 %v1397, 1.0
    %v1399 = vrcp.pop %v1398
    %v1400 = vmul.f32 1.0, %v1399
    %v1401 = vtanh.pop %v1394
    %v1402 = vmul.f32 %v1400, %v1203
    %1404 = vrot.lane.b32.xlu0 %v1401, 32
    %v1405 = vpop.permute.xlu0 %1404
    %v1407 = vmul.f32 %v1400, %v1405
    %1409 = vrot.lane.b32.xlu0 %v1407, 32
    %v1410 = vpop.permute.xlu0 %1409
    %v1412 = vadd.f32 %v1402, %v1410
    %v1413 = vtanh.pop %v1412
    %1415 = vrot.lane.b32.xlu0 %v1413, 32
    %v1416 = vpop.permute.xlu0 %1415
    %v1418 = vmul.f32 %v1400, %v1416
    %v1419 = vmul.f32 %v1418, %v998
    %1421 = vrot.lane.b32.xlu0 %v1419, 64
    %v1422 = vpop.permute.xlu0 %1421
    %v1424 = vsel %vm722, %v1422, 0.0
    %1425 = vadd.xlane.f32.xlu0 %v1424
    %v1426 = vpop.xlane.xlu0 %1425
    %v1427 = vadd.f32 %v1426, %v1008
    %s1428 = sld [smem:[#allocation4 + $0x2]]
    %p1429 = scmp.gt.s32.totalorder %s1428, 0
    %s1430 = scalar_select %p1429, 1, 0
    %v1431 = vstv %s1430
    %vm1432 = vcmp.eq.s32.totalorder %v1431, 1
    %v1433 = vsel %vm1432, %v673, %v1427
    %v1434 = vmul.f32 %v1418, %v757
    %1436 = vrot.lane.b32.xlu0 %v1434, 64
    %v1437 = vpop.permute.xlu0 %1436
    %v1439 = vsel %vm722, %v1437, 0.0
    %1440 = vadd.xlane.f32.xlu0 %v1439
    %v1441 = vpop.xlane.xlu0 %1440
    %v1442 = vadd.f32 %v748, %v1441
    %v1443 = vadd.f32 %v749, %v1441
    %v1444 = vadd.f32 %v750, %v1441
    %v1445 = vadd.f32 %v751, %v1441
    %v1446 = vadd.f32 %v752, %v1441
    %v1447 = vadd.f32 %v753, %v1441
    %v1448 = vadd.f32 %v754, %v1441
    %v1449 = vadd.f32 %v755, %v1441
    %v1450 = vmax.f32 %v1442, 0.0
    %v1451 = vmax.f32 %v1443, 0.0
    %v1452 = vmax.f32 %v1444, 0.0
    %v1453 = vmax.f32 %v1445, 0.0
    %v1454 = vmax.f32 %v1446, 0.0
    %v1455 = vmax.f32 %v1447, 0.0
    %v1456 = vmax.f32 %v1448, 0.0
    %v1457 = vmax.f32 %v1449, 0.0
    %v1458 = vsel %vm783, %v1450, -inf
    %v1459 = vsel %vm783, %v1451, -inf
    %v1460 = vsel %vm783, %v1452, -inf
    %v1461 = vsel %vm783, %v1453, -inf
    %v1462 = vsel %vm783, %v1454, -inf
    %v1463 = vmax.f32 %v1458, %v1462
    %v1464 = vsel %vm783, %v1455, -inf
    %v1465 = vmax.f32 %v1459, %v1464
    %v1466 = vsel %vm783, %v1456, -inf
    %v1467 = vmax.f32 %v1460, %v1466
    %v1468 = vsel %vm783, %v1457, -inf
    %v1469 = vmax.f32 %v1461, %v1468
    %v1470 = vmax.f32 %v1463, %v1465
    %v1471 = vmax.f32 %v1467, %v1469
    %v1472 = vmax.f32 %v1470, %v1471
    %v1473 = vsub.f32 %v1450, %v1472
    %v1474 = vsub.f32 %v1451, %v1472
    %v1475 = vsub.f32 %v1452, %v1472
    %v1476 = vsub.f32 %v1453, %v1472
    %v1477 = vsub.f32 %v1454, %v1472
    %v1478 = vsub.f32 %v1455, %v1472
    %v1479 = vsub.f32 %v1456, %v1472
    %v1480 = vsub.f32 %v1457, %v1472
    %v1481 = vmul.f32 %v1473, 1.442695
    %v1482 = vpow.pop %v1481
    %v1483 = vmul.f32 %v1474, 1.442695
    %v1484 = vpow.pop %v1483
    %v1485 = vmul.f32 %v1475, 1.442695
    %v1486 = vpow.pop %v1485
    %v1487 = vmul.f32 %v1476, 1.442695
    %v1488 = vpow.pop %v1487
    %v1489 = vmul.f32 %v1477, 1.442695
    %v1490 = vpow.pop %v1489
    %v1491 = vmul.f32 %v1478, 1.442695
    %v1492 = vpow.pop %v1491
    %v1493 = vmul.f32 %v1479, 1.442695
    %v1494 = vpow.pop %v1493
    %v1495 = vmul.f32 %v1480, 1.442695
    %v1496 = vpow.pop %v1495
    %v1497 = vsel %vm783, %v1482, 0.0
    %v1498 = vsel %vm783, %v1484, 0.0
    %v1499 = vadd.f32 %v1497, %v1498
    %v1500 = vsel %vm783, %v1486, 0.0
    %v1501 = vadd.f32 %v1499, %v1500
    %v1502 = vsel %vm783, %v1488, 0.0
    %v1503 = vadd.f32 %v1501, %v1502
    %v1504 = vsel %vm783, %v1490, 0.0
    %v1505 = vadd.f32 %v1503, %v1504
    %v1506 = vsel %vm783, %v1492, 0.0
    %v1507 = vadd.f32 %v1505, %v1506
    %v1508 = vsel %vm783, %v1494, 0.0
    %v1509 = vadd.f32 %v1507, %v1508
    %v1510 = vsel %vm783, %v1496, 0.0
    %v1511 = vadd.f32 %v1509, %v1510
    %v1512 = vrcp.pop %v1511
    %v1513 = vmul.f32 %v1482, %v1512
    %v1514 = vmul.f32 %v1484, %v1512
    %v1515 = vmul.f32 %v1486, %v1512
    %v1516 = vmul.f32 %v1488, %v1512
    %v1517 = vmul.f32 %v1490, %v1512
    %v1518 = vmul.f32 %v1492, %v1512
    %v1519 = vmul.f32 %v1494, %v1512
    %v1520 = vmul.f32 %v1496, %v1512
    %v1521 = vmul.f32 %v1513, %v140
    %v1522 = vmul.f32 %v1514, %v214
    %v1523 = vmul.f32 %v1515, %v288
    %v1524 = vmul.f32 %v1516, %v362
    %v1525 = vmul.f32 %v1517, %v436
    %v1526 = vmul.f32 %v1518, %v510
    %v1527 = vmul.f32 %v1519, %v584
    %v1528 = vmul.f32 %v1520, %v658
    %v1529 = vsel %vm855, %v1521, 0.0
    %v1530 = vsel %vm855, %v1522, 0.0
    %v1531 = vadd.f32 %v1529, %v1530
    %v1532 = vsel %vm855, %v1523, 0.0
    %v1533 = vadd.f32 %v1531, %v1532
    %v1534 = vsel %vm855, %v1524, 0.0
    %v1535 = vadd.f32 %v1533, %v1534
    %v1536 = vsel %vm855, %v1525, 0.0
    %v1537 = vadd.f32 %v1535, %v1536
    %v1538 = vsel %vm855, %v1526, 0.0
    %v1539 = vadd.f32 %v1537, %v1538
    %v1540 = vsel %vm855, %v1527, 0.0
    %v1541 = vadd.f32 %v1539, %v1540
    %v1542 = vsel %vm855, %v1528, 0.0
    %v1543 = vadd.f32 %v1541, %v1542
    %1545 = vrot.lane.b32.xlu0 %v1543, 64
    %v1546 = vpop.permute.xlu0 %1545
    %1549 = vrot.lane.b32.xlu0 %v1418, 96
    %v1550 = vpop.permute.xlu0 %1549
    %v1552 = vsel %vm72, %v1546, %v1550
    %v1553 = vpack.c.bf16 %v1552, %v1552
    %1555 = vset.pattern.permute.xlu0 2
    %1556 = vperm.xlu0 %1555, %v1433
    %v1557 = vpop.permute.xlu0 %1556
    %v1559 = vmul.f32 %v1557, %v890
    %v1561 = vsel %vm917, %v1553, 0
    %1563 = vmatprep.subr.bf16.mxu0 0
    %1564 = vmatpush1.bf16.msra.mxu0 %v909
    %1565 = vmatprep.subr.bf16.mxu0 0
    %1566 = vmatpush1.bf16.msra.mxu0 %v910
    %1567 = vmatprep.subr.bf16.mxu0 0
    %1568 = vmatpush1.bf16.msra.mxu0 %v911
    %1569 = vmatprep.subr.bf16.mxu0 0
    %1570 = vmatpush1.bf16.msra.mxu0 %v912
    %1571 = vmatprep.subr.bf16.mxu0 0
    %1572 = vmatpush1.bf16.msra.mxu0 0
    %1573 = vmatprep.subr.bf16.mxu0 0
    %1574 = vmatpush1.bf16.msra.mxu0 0
    %1575 = vmatprep.subr.bf16.mxu0 0
    %1576 = vmatpush1.bf16.msra.mxu0 0
    %1577 = vmatprep.subr.bf16.mxu0 0
    %1578 = vmatpush1.bf16.msra.mxu0 0
    %1579 = vmatprep.subr.bf16.mxu0 0
    %1580 = vmatpush1.bf16.msra.mxu0 0
    %1581 = vmatprep.subr.bf16.mxu0 0
    %1582 = vmatpush1.bf16.msra.mxu0 0
    %1583 = vmatprep.subr.bf16.mxu0 0
    %1584 = vmatpush1.bf16.msra.mxu0 0
    %1585 = vmatprep.subr.bf16.mxu0 0
    %1586 = vmatpush1.bf16.msra.mxu0 0
    %1587 = vmatprep.subr.bf16.mxu0 0
    %1588 = vmatpush1.bf16.msra.mxu0 0
    %1589 = vmatprep.subr.bf16.mxu0 0
    %1590 = vmatpush1.bf16.msra.mxu0 0
    %1591 = vmatprep.subr.bf16.mxu0 0
    %1592 = vmatpush1.bf16.msra.mxu0 0
    %1593 = vmatprep.subr.bf16.mxu0 0
    %1594 = vmatpush1.bf16.msra.mxu0 0
    %1595 = vmatprep.mubr.bf16.mxu0 0
    %1596 = vmatmul.mubr.bf16.gmra.mrb[0].mxu0 %v1561
    %v1597 = vpop.f32.mrb[0].mxu0
    %v1598 = vadd.f32 %v1559, %v1597
    %v1599 = vpop.f32.mrb[0].mxu0
    %v1600 = vpop.f32.mrb[0].mxu0
    %v1601 = vpop.f32.mrb[0].mxu0
    %1602 = vdwg.mxu0
    %v1603 = vadd.f32 %v1598, %v965
    %v1604 = vxor.u32 %v1603, 2147483648
    %v1605 = vmul.f32 %v1604, 1.442695
    %v1606 = vpow.pop %v1605
    %v1607 = vadd.f32 %v1606, 1.0
    %v1608 = vrcp.pop %v1607
    %v1609 = vmul.f32 1.0, %v1608
    %v1610 = vtanh.pop %v1603
    %v1611 = vmul.f32 %v1609, %v1412
    %1613 = vrot.lane.b32.xlu0 %v1610, 32
    %v1614 = vpop.permute.xlu0 %1613
    %v1616 = vmul.f32 %v1609, %v1614
    %1618 = vrot.lane.b32.xlu0 %v1616, 32
    %v1619 = vpop.permute.xlu0 %1618
    %v1621 = vadd.f32 %v1611, %v1619
    %v1622 = vtanh.pop %v1621
    %1624 = vrot.lane.b32.xlu0 %v1622, 32
    %v1625 = vpop.permute.xlu0 %1624
    %v1627 = vmul.f32 %v1609, %v1625
    %v1628 = vmul.f32 %v1627, %v998
    %1630 = vrot.lane.b32.xlu0 %v1628, 64
    %v1631 = vpop.permute.xlu0 %1630
    %v1633 = vsel %vm722, %v1631, 0.0
    %1634 = vadd.xlane.f32.xlu0 %v1633
    %v1635 = vpop.xlane.xlu0 %1634
    %v1636 = vadd.f32 %v1635, %v1008
    %vm1637 = vcmask 7168
    %v1638 = vsel %vm1637, %v1009, %v1218
    %vm1639 = vcmask 15360
    %v1640 = vsel %vm1639, %v1638, %v1427
    %vm1641 = vcmask 23552
    %v1642 = vsel %vm1641, %v1640, %v1636
    %vm1643 = vcmask 25600
    %1644 = vst.msk [vmem:[#allocation7] sm:$0x3] %vm1643, %v1642
    // Predicated region
    $region50: #{seq2seq_forward.1} parent=1 // pred_check
      _
    $region51: #{seq2seq_forward.1} parent=1 // pred_check_branch
      %1646 = sbr.rel (0) target = $region53
    $region52: #{seq2seq_forward.1} parent=1 // pred_region
      %s1648 = ssub.s32 32, 32
      %1649 = vsyncadd [#allocation5], %s1648
      %s1651 = sshll.u32 [#allocation7], 4
      %s1652 = int_to_ptr.vmem [resolvable:$true] %s1651
      %1654 = dma.vmem_to_hbm [thread:$0]  %s1652, 32, %s11, [#allocation5]
    $region53: #{seq2seq_forward.1} parent=1 // pred_fallthru
      _
    // Predicated region
    $region54: #{seq2seq_forward.1} parent=1 // pred_check
      _
    $region55: #{seq2seq_forward.1} parent=1 // pred_check_branch
      %1656 = sbr.rel (0) target = $region57
    $region56: #{seq2seq_forward.1} parent=1 // pred_region
      %1657 = dma.done [#allocation5], 32
    $region57: #{seq2seq_forward.1} parent=1 // pred_fallthru
      _
    %1658 = vsyncpa [#allocation5], 1
    %1659 = vsyncpa [#allocation6], 1

</llo_original>
